<compile_context>
chip_gen: v7x
topology: tpu7x:2x2x1
jax: 0.10.0
libtpu: 0.0.40
codegen_flags: <defaults>
</compile_context>

<pallas_src>
import math

import jax
import jax.numpy as jnp
from jax.experimental import pallas as pl
from jax.experimental.pallas import tpu as pltpu

EPS = 0.0          # GINConv default eps (train_eps=False)
LANE = 128         # TPU lane width


# ------------------------------- helpers ----------------------------------- #

def _round_up(n, m):
    return ((n + m - 1) // m) * m


def _pad2d(x, rows, cols, dtype):
    """Zero-pad a 2-D array up to (rows, cols) and cast."""
    out = jnp.zeros((rows, cols), dtype)
    return out.at[: x.shape[0], : x.shape[1]].set(x.astype(dtype))


# ----------------------------- Pallas kernels ------------------------------ #

def _layer_body(a_ref, xk_ref, xr_ref, w1_ref, b1_ref, w2_ref, b2_ref,
                o_ref, acc_ref, head_refs):
    """One GIN layer: streamed-A aggregation + MLP (+ optional fused head)."""
    k = pl.program_id(1)

    @pl.when(k == 0)
    def _():
        # (1 + eps) * x self term; eps == 0 drops the multiply at trace time.
        xr = xr_ref[...].astype(jnp.float32)
        acc_ref[...] = (1.0 + EPS) * xr if EPS != 0.0 else xr

    # Neighbor-sum aggregation: streamed A tile @ x tile on the MXU, f32 accumulate.
    acc_ref[...] += jnp.dot(a_ref[...], xk_ref[...],
                            preferred_element_type=jnp.float32)

    @pl.when(k == pl.num_programs(1) - 1)
    def _():
        h = acc_ref[...]
        # GINConv MLP: Linear -> ReLU -> Linear (bf16 operands, f32 accumulation)
        h = jnp.dot(h.astype(jnp.bfloat16), w1_ref[...],
                    preferred_element_type=jnp.float32) + b1_ref[...]
        h = jnp.maximum(h, 0.0)
        h = jnp.dot(h.astype(jnp.bfloat16), w2_ref[...],
                    preferred_element_type=jnp.float32) + b2_ref[...]
        # outer F.relu in GIN.forward; dropout(p=0.5) is identity in eval mode
        h = jnp.maximum(h, 0.0)
        if head_refs is None:
            o_ref[...] = h.astype(o_ref.dtype)
        else:
            wr_ref, br_ref = head_refs
            o_ref[...] = (jnp.dot(h.astype(jnp.bfloat16), wr_ref[...],
                                  preferred_element_type=jnp.float32)
                          + br_ref[...])


def _make_layer_kernel(fuse_head):
    if fuse_head:
        def kernel(a_ref, xk_ref, xr_ref, w1_ref, b1_ref, w2_ref, b2_ref,
                   wr_ref, br_ref, o_ref, acc_ref):
            _layer_body(a_ref, xk_ref, xr_ref, w1_ref, b1_ref, w2_ref, b2_ref,
                        o_ref, acc_ref, (wr_ref, br_ref))
        return kernel

    def kernel(a_ref, xk_ref, xr_ref, w1_ref, b1_ref, w2_ref, b2_ref,
               o_ref, acc_ref):
        _layer_body(a_ref, xk_ref, xr_ref, w1_ref, b1_ref, w2_ref, b2_ref,
                    o_ref, acc_ref, None)
    return kernel


# --------------------------- per-layer pallas_call -------------------------- #

def _vmem_budget(row_tile, k_tile, fin_pad, h_pad, o_cols, out_itemsize, has_head):
    b = 0
    b += 2 * row_tile * k_tile * 2                        # A tiles (bf16, double buffered)
    b += 2 * k_tile * fin_pad * 2                         # x neighbor tiles (bf16)
    b += 2 * row_tile * fin_pad * 2                       # x self tiles (bf16)
    b += 2 * (fin_pad * h_pad * 2 + h_pad * 4             # w1 / b1
              + h_pad * h_pad * 2 + h_pad * 4)            # w2 / b2
    if has_head:
        b += 2 * (h_pad * o_cols * 2 + o_cols * 4)        # wr / br
    b += 2 * row_tile * o_cols * out_itemsize             # output tile
    b += row_tile * fin_pad * 4                           # f32 accumulator scratch
    b += 2 << 20                                          # headroom
    return min(b, 64 << 20)                               # stay under v7x physical VMEM


def _gin_layer_call(a, x, w1, b1, w2, b2, head, *, row_tile, k_tile):
    n_pad = a.shape[0]
    fin_pad = x.shape[1]
    h_pad = w1.shape[1]
    grid = (n_pad // row_tile, n_pad // k_tile)

    const2 = lambda i, k: (0, 0)   # weights stay resident across grid steps

    in_specs = [
        # A is the only quadratic operand: streamed tile-by-tile from HBM.
        # TODO(synk): pipeline_mode=pl.Buffered(3) here if the A DMA is exposed on v5e.
        pl.BlockSpec((row_tile, k_tile), lambda i, k: (i, k)),
        pl.BlockSpec((k_tile, fin_pad), lambda i, k: (k, 0)),    # x neighbor tile
        pl.BlockSpec((row_tile, fin_pad), lambda i, k: (i, 0)),  # x self tile
        pl.BlockSpec((fin_pad, h_pad), const2),
        pl.BlockSpec((1, h_pad), const2),
        pl.BlockSpec((h_pad, h_pad), const2),
        pl.BlockSpec((1, h_pad), const2),
    ]
    inputs = [a, x, x, w1, b1, w2, b2]

    if head is not None:
        wr, br = head
        o_cols = wr.shape[1]
        in_specs += [pl.BlockSpec((h_pad, o_cols), const2),
                     pl.BlockSpec((1, o_cols), const2)]
        inputs += [wr, br]
        out_dtype = jnp.float32
    else:
        o_cols = h_pad
        out_dtype = jnp.bfloat16

    out_itemsize = jnp.dtype(out_dtype).itemsize
    out_shape = jax.ShapeDtypeStruct((n_pad, o_cols), out_dtype)
    out_spec = pl.BlockSpec((row_tile, o_cols), lambda i, k: (i, 0))

    flops = (2 * n_pad * n_pad * fin_pad           # A @ x
             + 2 * n_pad * fin_pad * h_pad         # h @ W1
             + 2 * n_pad * h_pad * h_pad)          # h @ W2
    if head is not None:
        flops += 2 * n_pad * h_pad * o_cols
    bytes_accessed = (n_pad * n_pad * 2                               # A
                      + (grid[0] + 1) * n_pad * fin_pad * 2           # x (re-read per row tile + self)
                      + sum(int(math.prod(w.shape)) * w.dtype.itemsize for w in inputs[3:])
                      + n_pad * o_cols * out_itemsize)

    return pl.pallas_call(
        _make_layer_kernel(head is not None),
        out_shape=out_shape,
        grid_spec=pltpu.PrefetchScalarGridSpec(
            num_scalar_prefetch=0,
            grid=grid,
            in_specs=in_specs,
            out_specs=out_spec,
            scratch_shapes=[pltpu.VMEM((row_tile, fin_pad), jnp.float32)],
        ),
        compiler_params=pltpu.CompilerParams(
            dimension_semantics=("parallel", "arbitrary"),
            vmem_limit_bytes=int(_vmem_budget(row_tile, k_tile, fin_pad, h_pad,
                                              o_cols, out_itemsize,
                                              head is not None)),
        ),
        cost_estimate=pl.CostEstimate(flops=flops, transcendentals=0,
                                      bytes_accessed=int(bytes_accessed)),
    )(*inputs)


# ------------------------------- wrappers ----------------------------------- #

def init_gin_params(key, input_dim, hidden_dim, layer_num=2):
    """Deterministic synthetic parameters matching the module's shapes."""
    params = {"convs": []}
    for i in range(layer_num):
        fin = input_dim if i == 0 else hidden_dim
        key, k1, k2 = jax.random.split(key, 3)
        w1 = jax.random.normal(k1, (fin, hidden_dim), jnp.float32) * (1.0 / jnp.sqrt(fin))
        b1 = jnp.zeros((1, hidden_dim), jnp.float32)
        w2 = jax.random.normal(k2, (hidden_dim, hidden_dim), jnp.float32) * (
            1.0 / jnp.sqrt(hidden_dim)
        )
        b2 = jnp.zeros((1, hidden_dim), jnp.float32)
        params["convs"].append((w1, b1, w2, b2))
    key, kr = jax.random.split(key)
    wr = jax.random.normal(kr, (hidden_dim, 1), jnp.float32) * (1.0 / jnp.sqrt(hidden_dim))
    br = jnp.zeros((1, 1), jnp.float32)
    params["regressor"] = (wr, br)
    return params


def gin_forward(x, edge_index, params):
    """Full GIN forward (eval mode), final_layer='regression'."""
    layer_num = len(params["convs"])
    n, f = x.shape
    hidden = params["convs"][0][0].shape[1]

    # MXU tile: 256 feeds the full 256x256 MXU on v6e/v7x; 128 at toy sizes.
    tile = LANE if n <= LANE else 256
    n_pad = _round_up(max(n, 8), tile)
    f_pad = _round_up(f, LANE)
    h_pad = _round_up(hidden, LANE)
    o_pad = LANE  # head output padded 1 -> 128 lanes; sliced back afterwards

    # Dense adjacency: message from src summed at dst. bf16 0/1 (multi-edge
    # counts <= 256) is exact.  Pad rows/cols of A are zero, so padded nodes
    # never leak into real rows.
    # TODO(synk): hoist/cache this scatter across calls for static graphs.
    src, dst = edge_index[0], edge_index[1]
    a = (jnp.zeros((n_pad, n_pad), jnp.float32)
         .at[dst, src].add(1.0)).astype(jnp.bfloat16)

    # Pre-cast the activation to bf16 in the wrapper (halves its DMA bytes).
    h = _pad2d(x, n_pad, f_pad, jnp.bfloat16)

    for li, (w1, b1, w2, b2) in enumerate(params["convs"]):
        fin_pad = f_pad if li == 0 else h_pad
        last = li == layer_num - 1
        w1p = _pad2d(w1, fin_pad, h_pad, jnp.bfloat16)
        b1p = _pad2d(b1, 1, h_pad, jnp.float32)
        w2p = _pad2d(w2, h_pad, h_pad, jnp.bfloat16)
        b2p = _pad2d(b2, 1, h_pad, jnp.float32)
        if last:
            wr, br = params["regressor"]
            head = (_pad2d(wr, h_pad, o_pad, jnp.bfloat16),
                    _pad2d(br, 1, o_pad, jnp.float32))
        else:
            head = None
        h = _gin_layer_call(a, h, w1p, b1p, w2p, b2p, head,
                            row_tile=tile, k_tile=tile)

    return h[:n, :1]


# --------------------------------- main ------------------------------------ #

if __name__ == "__main__":
    key = jax.random.PRNGKey(0)

    num_nodes = 8
    input_dim = 4
    hidden_dim = 32
    layer_num = 2

    key, kx = jax.random.split(key)
    x = jax.random.normal(kx, (num_nodes, input_dim), jnp.float32)

    # small directed graph (ring + a few shortcuts), edge_index shape [2, E]
    src = jnp.array([0, 1, 2, 3, 4, 5, 6, 7, 0, 2, 5], dtype=jnp.int32)
    dst = jnp.array([1, 2, 3, 4, 5, 6, 7, 0, 4, 6, 1], dtype=jnp.int32)
    edge_index = jnp.stack([src, dst], axis=0)

    params = init_gin_params(key, input_dim, hidden_dim, layer_num=layer_num)

    out = jax.jit(gin_forward)(x, edge_index, params)
    out = jax.block_until_ready(out)

    assert out.shape == (num_nodes, 1), out.shape
    assert bool(jnp.all(jnp.isfinite(out)))
    print("KERNEL_OK")
</pallas_src>

<mosaic_0001>
module attributes {stable_mosaic.version = 11 : i64} {
  func.func @kernel(%arg0: i32, %arg1: i32, %arg2: memref<128x128xbf16, #tpu.memory_space<vmem>>, %arg3: memref<128x128xbf16, #tpu.memory_space<vmem>>, %arg4: memref<128x128xbf16, #tpu.memory_space<vmem>>, %arg5: memref<128x128xbf16, #tpu.memory_space<vmem>>, %arg6: memref<1x128xf32, #tpu.memory_space<vmem>>, %arg7: memref<128x128xbf16, #tpu.memory_space<vmem>>, %arg8: memref<1x128xf32, #tpu.memory_space<vmem>>, %arg9: memref<128x128xbf16, #tpu.memory_space<vmem>>, %arg10: memref<128x128xf32, #tpu.memory_space<vmem>>) attributes {dimension_semantics = [#tpu.dimension_semantics<parallel>, #tpu.dimension_semantics<arbitrary>], iteration_bounds = array<i64: 1, 1>, scalar_prefetch = 0 : i64, scratch_operands = 1 : i64, tpu.core_type = #tpu.core_type<tc>, window_params = [{transform_indices = @transform_0, window_bounds = array<i64: 128, 128>}, {transform_indices = @transform_1, window_bounds = array<i64: 128, 128>}, {transform_indices = @transform_2, window_bounds = array<i64: 128, 128>}, {pipeline_mode = #tpu.pipeline_mode<synchronous>, transform_indices = @transform_3, window_bounds = array<i64: 128, 128>}, {pipeline_mode = #tpu.pipeline_mode<synchronous>, transform_indices = @transform_4, window_bounds = array<i64: 1, 128>}, {pipeline_mode = #tpu.pipeline_mode<synchronous>, transform_indices = @transform_5, window_bounds = array<i64: 128, 128>}, {pipeline_mode = #tpu.pipeline_mode<synchronous>, transform_indices = @transform_6, window_bounds = array<i64: 1, 128>}, {transform_indices = @transform_7, window_bounds = array<i64: 128, 128>}]} {
    %c0_i32 = arith.constant 0 : i32
    %0 = arith.cmpi eq, %arg1, %c0_i32 : i32
    %1 = arith.extui %0 : i1 to i32
    %c0_i32_0 = arith.constant 0 : i32
    %2 = arith.cmpi ne, %1, %c0_i32_0 : i32
    scf.if %2 {
      %c0_10 = arith.constant 0 : index
      %c0_11 = arith.constant 0 : index
      %12 = vector.load %arg4[%c0_10, %c0_11] : memref<128x128xbf16, #tpu.memory_space<vmem>>, vector<128x128xbf16>
      %13 = arith.extf %12 : vector<128x128xbf16> to vector<128x128xf32>
      %c0_12 = arith.constant 0 : index
      %c0_13 = arith.constant 0 : index
      %14 = vector.load %arg10[%c0_12, %c0_13] : memref<128x128xf32, #tpu.memory_space<vmem>>, vector<128x128xf32>
      tpu.vector_store %arg10[%c0_12, %c0_13], %13 {strides = array<i32>} : memref<128x128xf32, #tpu.memory_space<vmem>>, vector<128x128xf32>,
    } else {
    }
    %c0 = arith.constant 0 : index
    %c0_1 = arith.constant 0 : index
    %3 = vector.load %arg10[%c0, %c0_1] : memref<128x128xf32, #tpu.memory_space<vmem>>, vector<128x128xf32>
    %c0_2 = arith.constant 0 : index
    %c0_3 = arith.constant 0 : index
    %4 = vector.load %arg2[%c0_2, %c0_3] : memref<128x128xbf16, #tpu.memory_space<vmem>>, vector<128x128xbf16>
    %c0_4 = arith.constant 0 : index
    %c0_5 = arith.constant 0 : index
    %5 = vector.load %arg3[%c0_4, %c0_5] : memref<128x128xbf16, #tpu.memory_space<vmem>>, vector<128x128xbf16>
    %cst = arith.constant dense<0.000000e+00> : vector<128x128xf32>
    %6 = tpu.matmul %4, %5, %cst {dimension_numbers = #tpu.dot_dimension_numbers<[1], [0], [0], [1], [0, 0, 1, 1], [], []>} : vector<128x128xbf16>, vector<128x128xbf16>, vector<128x128xf32> -> vector<128x128xf32>
    %7 = arith.addf %3, %6 : vector<128x128xf32>
    %c0_6 = arith.constant 0 : index
    %c0_7 = arith.constant 0 : index
    %8 = vector.load %arg10[%c0_6, %c0_7] : memref<128x128xf32, #tpu.memory_space<vmem>>, vector<128x128xf32>
    tpu.vector_store %arg10[%c0_6, %c0_7], %7 {strides = array<i32>} : memref<128x128xf32, #tpu.memory_space<vmem>>, vector<128x128xf32>,
    %c0_i32_8 = arith.constant 0 : i32
    %9 = arith.cmpi eq, %arg1, %c0_i32_8 : i32
    %10 = arith.extui %9 : i1 to i32
    %c0_i32_9 = arith.constant 0 : i32
    %11 = arith.cmpi ne, %10, %c0_i32_9 : i32
    scf.if %11 {
      %c0_10 = arith.constant 0 : index
      %c0_11 = arith.constant 0 : index
      %12 = vector.load %arg10[%c0_10, %c0_11] : memref<128x128xf32, #tpu.memory_space<vmem>>, vector<128x128xf32>
      %13 = arith.truncf %12 : vector<128x128xf32> to vector<128x128xbf16>
      %c0_12 = arith.constant 0 : index
      %c0_13 = arith.constant 0 : index
      %14 = vector.load %arg5[%c0_12, %c0_13] : memref<128x128xbf16, #tpu.memory_space<vmem>>, vector<128x128xbf16>
      %cst_14 = arith.constant dense<0.000000e+00> : vector<128x128xf32>
      %15 = tpu.matmul %13, %14, %cst_14 {dimension_numbers = #tpu.dot_dimension_numbers<[1], [0], [0], [1], [0, 0, 1, 1], [], []>} : vector<128x128xbf16>, vector<128x128xbf16>, vector<128x128xf32> -> vector<128x128xf32>
      %c0_15 = arith.constant 0 : index
      %c0_16 = arith.constant 0 : index
      %16 = vector.load %arg6[%c0_15, %c0_16] : memref<1x128xf32, #tpu.memory_space<vmem>>, vector<1x128xf32>
      %17 = vector.broadcast %16 : vector<1x128xf32> to vector<128x128xf32>
      %18 = arith.addf %15, %17 : vector<128x128xf32>
      %cst_17 = arith.constant 0.000000e+00 : f32
      %19 = vector.broadcast %cst_17 : f32 to vector<128x128xf32>
      %20 = arith.maximumf %18, %19 : vector<128x128xf32>
      %21 = arith.truncf %20 : vector<128x128xf32> to vector<128x128xbf16>
      %c0_18 = arith.constant 0 : index
      %c0_19 = arith.constant 0 : index
      %22 = vector.load %arg7[%c0_18, %c0_19] : memref<128x128xbf16, #tpu.memory_space<vmem>>, vector<128x128xbf16>
      %cst_20 = arith.constant dense<0.000000e+00> : vector<128x128xf32>
      %23 = tpu.matmul %21, %22, %cst_20 {dimension_numbers = #tpu.dot_dimension_numbers<[1], [0], [0], [1], [0, 0, 1, 1], [], []>} : vector<128x128xbf16>, vector<128x128xbf16>, vector<128x128xf32> -> vector<128x128xf32>
      %c0_21 = arith.constant 0 : index
      %c0_22 = arith.constant 0 : index
      %24 = vector.load %arg8[%c0_21, %c0_22] : memref<1x128xf32, #tpu.memory_space<vmem>>, vector<1x128xf32>
      %25 = vector.broadcast %24 : vector<1x128xf32> to vector<128x128xf32>
      %26 = arith.addf %23, %25 : vector<128x128xf32>
      %cst_23 = arith.constant 0.000000e+00 : f32
      %27 = vector.broadcast %cst_23 : f32 to vector<128x128xf32>
      %28 = arith.maximumf %26, %27 : vector<128x128xf32>
      %29 = arith.truncf %28 : vector<128x128xf32> to vector<128x128xbf16>
      %c0_24 = arith.constant 0 : index
      %c0_25 = arith.constant 0 : index
      %30 = vector.load %arg9[%c0_24, %c0_25] : memref<128x128xbf16, #tpu.memory_space<vmem>>, vector<128x128xbf16>
      tpu.vector_store %arg9[%c0_24, %c0_25], %29 {strides = array<i32>} : memref<128x128xbf16, #tpu.memory_space<vmem>>, vector<128x128xbf16>,
    } else {
    }
    return
  }
  func.func @transform_0(%arg0: i32, %arg1: i32) -> (i32, i32) {
    %c0_i32 = arith.constant 0 : i32
    return %arg0, %arg1 : i32, i32
  }
  func.func @transform_1(%arg0: i32, %arg1: i32) -> (i32, i32) {
    %c0_i32 = arith.constant 0 : i32
    %c0_i32_0 = arith.constant 0 : i32
    return %arg1, %c0_i32 : i32, i32
  }
  func.func @transform_2(%arg0: i32, %arg1: i32) -> (i32, i32) {
    %c0_i32 = arith.constant 0 : i32
    %c0_i32_0 = arith.constant 0 : i32
    return %arg0, %c0_i32 : i32, i32
  }
  func.func @transform_3(%arg0: i32, %arg1: i32) -> (i32, i32) {
    %c0_i32 = arith.constant 0 : i32
    %c0_i32_0 = arith.constant 0 : i32
    %c0_i32_1 = arith.constant 0 : i32
    return %c0_i32, %c0_i32_0 : i32, i32
  }
  func.func @transform_4(%arg0: i32, %arg1: i32) -> (i32, i32) {
    %c0_i32 = arith.constant 0 : i32
    %c0_i32_0 = arith.constant 0 : i32
    %c0_i32_1 = arith.constant 0 : i32
    return %c0_i32, %c0_i32_0 : i32, i32
  }
  func.func @transform_5(%arg0: i32, %arg1: i32) -> (i32, i32) {
    %c0_i32 = arith.constant 0 : i32
    %c0_i32_0 = arith.constant 0 : i32
    %c0_i32_1 = arith.constant 0 : i32
    return %c0_i32, %c0_i32_0 : i32, i32
  }
  func.func @transform_6(%arg0: i32, %arg1: i32) -> (i32, i32) {
    %c0_i32 = arith.constant 0 : i32
    %c0_i32_0 = arith.constant 0 : i32
    %c0_i32_1 = arith.constant 0 : i32
    return %c0_i32, %c0_i32_0 : i32, i32
  }
  func.func @transform_7(%arg0: i32, %arg1: i32) -> (i32, i32) {
    %c0_i32 = arith.constant 0 : i32
    %c0_i32_0 = arith.constant 0 : i32
    return %arg0, %c0_i32 : i32, i32
  }
}

module attributes {stable_mosaic.version = 11 : i64} {
  func.func @kernel(%arg0: i32, %arg1: i32, %arg2: memref<128x128xbf16, #tpu.memory_space<vmem>>, %arg3: memref<128x128xbf16, #tpu.memory_space<vmem>>, %arg4: memref<128x128xbf16, #tpu.memory_space<vmem>>, %arg5: memref<128x128xbf16, #tpu.memory_space<vmem>>, %arg6: memref<1x128xf32, #tpu.memory_space<vmem>>, %arg7: memref<128x128xbf16, #tpu.memory_space<vmem>>, %arg8: memref<1x128xf32, #tpu.memory_space<vmem>>, %arg9: memref<128x128xbf16, #tpu.memory_space<vmem>>, %arg10: memref<1x128xf32, #tpu.memory_space<vmem>>, %arg11: memref<128x128xf32, #tpu.memory_space<vmem>>, %arg12: memref<128x128xf32, #tpu.memory_space<vmem>>) attributes {dimension_semantics = [#tpu.dimension_semantics<parallel>, #tpu.dimension_semantics<arbitrary>], iteration_bounds = array<i64: 1, 1>, scalar_prefetch = 0 : i64, scratch_operands = 1 : i64, tpu.core_type = #tpu.core_type<tc>, window_params = [{transform_indices = @transform_0, window_bounds = array<i64: 128, 128>}, {transform_indices = @transform_1, window_bounds = array<i64: 128, 128>}, {transform_indices = @transform_2, window_bounds = array<i64: 128, 128>}, {pipeline_mode = #tpu.pipeline_mode<synchronous>, transform_indices = @transform_3, window_bounds = array<i64: 128, 128>}, {pipeline_mode = #tpu.pipeline_mode<synchronous>, transform_indices = @transform_4, window_bounds = array<i64: 1, 128>}, {pipeline_mode = #tpu.pipeline_mode<synchronous>, transform_indices = @transform_5, window_bounds = array<i64: 128, 128>}, {pipeline_mode = #tpu.pipeline_mode<synchronous>, transform_indices = @transform_6, window_bounds = array<i64: 1, 128>}, {pipeline_mode = #tpu.pipeline_mode<synchronous>, transform_indices = @transform_7, window_bounds = array<i64: 128, 128>}, {pipeline_mode = #tpu.pipeline_mode<synchronous>, transform_indices = @transform_8, window_bounds = array<i64: 1, 128>}, {transform_indices = @transform_9, window_bounds = array<i64: 128, 128>}]} {
    %c0_i32 = arith.constant 0 : i32
    %0 = arith.cmpi eq, %arg1, %c0_i32 : i32
    %1 = arith.extui %0 : i1 to i32
    %c0_i32_0 = arith.constant 0 : i32
    %2 = arith.cmpi ne, %1, %c0_i32_0 : i32
    scf.if %2 {
      %c0_10 = arith.constant 0 : index
      %c0_11 = arith.constant 0 : index
      %12 = vector.load %arg4[%c0_10, %c0_11] : memref<128x128xbf16, #tpu.memory_space<vmem>>, vector<128x128xbf16>
      %13 = arith.extf %12 : vector<128x128xbf16> to vector<128x128xf32>
      %c0_12 = arith.constant 0 : index
      %c0_13 = arith.constant 0 : index
      %14 = vector.load %arg12[%c0_12, %c0_13] : memref<128x128xf32, #tpu.memory_space<vmem>>, vector<128x128xf32>
      tpu.vector_store %arg12[%c0_12, %c0_13], %13 {strides = array<i32>} : memref<128x128xf32, #tpu.memory_space<vmem>>, vector<128x128xf32>,
    } else {
    }
    %c0 = arith.constant 0 : index
    %c0_1 = arith.constant 0 : index
    %3 = vector.load %arg12[%c0, %c0_1] : memref<128x128xf32, #tpu.memory_space<vmem>>, vector<128x128xf32>
    %c0_2 = arith.constant 0 : index
    %c0_3 = arith.constant 0 : index
    %4 = vector.load %arg2[%c0_2, %c0_3] : memref<128x128xbf16, #tpu.memory_space<vmem>>, vector<128x128xbf16>
    %c0_4 = arith.constant 0 : index
    %c0_5 = arith.constant 0 : index
    %5 = vector.load %arg3[%c0_4, %c0_5] : memref<128x128xbf16, #tpu.memory_space<vmem>>, vector<128x128xbf16>
    %cst = arith.constant dense<0.000000e+00> : vector<128x128xf32>
    %6 = tpu.matmul %4, %5, %cst {dimension_numbers = #tpu.dot_dimension_numbers<[1], [0], [0], [1], [0, 0, 1, 1], [], []>} : vector<128x128xbf16>, vector<128x128xbf16>, vector<128x128xf32> -> vector<128x128xf32>
    %7 = arith.addf %3, %6 : vector<128x128xf32>
    %c0_6 = arith.constant 0 : index
    %c0_7 = arith.constant 0 : index
    %8 = vector.load %arg12[%c0_6, %c0_7] : memref<128x128xf32, #tpu.memory_space<vmem>>, vector<128x128xf32>
    tpu.vector_store %arg12[%c0_6, %c0_7], %7 {strides = array<i32>} : memref<128x128xf32, #tpu.memory_space<vmem>>, vector<128x128xf32>,
    %c0_i32_8 = arith.constant 0 : i32
    %9 = arith.cmpi eq, %arg1, %c0_i32_8 : i32
    %10 = arith.extui %9 : i1 to i32
    %c0_i32_9 = arith.constant 0 : i32
    %11 = arith.cmpi ne, %10, %c0_i32_9 : i32
    scf.if %11 {
      %c0_10 = arith.constant 0 : index
      %c0_11 = arith.constant 0 : index
      %12 = vector.load %arg12[%c0_10, %c0_11] : memref<128x128xf32, #tpu.memory_space<vmem>>, vector<128x128xf32>
      %13 = arith.truncf %12 : vector<128x128xf32> to vector<128x128xbf16>
      %c0_12 = arith.constant 0 : index
      %c0_13 = arith.constant 0 : index
      %14 = vector.load %arg5[%c0_12, %c0_13] : memref<128x128xbf16, #tpu.memory_space<vmem>>, vector<128x128xbf16>
      %cst_14 = arith.constant dense<0.000000e+00> : vector<128x128xf32>
      %15 = tpu.matmul %13, %14, %cst_14 {dimension_numbers = #tpu.dot_dimension_numbers<[1], [0], [0], [1], [0, 0, 1, 1], [], []>} : vector<128x128xbf16>, vector<128x128xbf16>, vector<128x128xf32> -> vector<128x128xf32>
      %c0_15 = arith.constant 0 : index
      %c0_16 = arith.constant 0 : index
      %16 = vector.load %arg6[%c0_15, %c0_16] : memref<1x128xf32, #tpu.memory_space<vmem>>, vector<1x128xf32>
      %17 = vector.broadcast %16 : vector<1x128xf32> to vector<128x128xf32>
      %18 = arith.addf %15, %17 : vector<128x128xf32>
      %cst_17 = arith.constant 0.000000e+00 : f32
      %19 = vector.broadcast %cst_17 : f32 to vector<128x128xf32>
      %20 = arith.maximumf %18, %19 : vector<128x128xf32>
      %21 = arith.truncf %20 : vector<128x128xf32> to vector<128x128xbf16>
      %c0_18 = arith.constant 0 : index
      %c0_19 = arith.constant 0 : index
      %22 = vector.load %arg7[%c0_18, %c0_19] : memref<128x128xbf16, #tpu.memory_space<vmem>>, vector<128x128xbf16>
      %cst_20 = arith.constant dense<0.000000e+00> : vector<128x128xf32>
      %23 = tpu.matmul %21, %22, %cst_20 {dimension_numbers = #tpu.dot_dimension_numbers<[1], [0], [0], [1], [0, 0, 1, 1], [], []>} : vector<128x128xbf16>, vector<128x128xbf16>, vector<128x128xf32> -> vector<128x128xf32>
      %c0_21 = arith.constant 0 : index
      %c0_22 = arith.constant 0 : index
      %24 = vector.load %arg8[%c0_21, %c0_22] : memref<1x128xf32, #tpu.memory_space<vmem>>, vector<1x128xf32>
      %25 = vector.broadcast %24 : vector<1x128xf32> to vector<128x128xf32>
      %26 = arith.addf %23, %25 : vector<128x128xf32>
      %cst_23 = arith.constant 0.000000e+00 : f32
      %27 = vector.broadcast %cst_23 : f32 to vector<128x128xf32>
      %28 = arith.maximumf %26, %27 : vector<128x128xf32>
      %29 = arith.truncf %28 : vector<128x128xf32> to vector<128x128xbf16>
      %c0_24 = arith.constant 0 : index
      %c0_25 = arith.constant 0 : index
      %30 = vector.load %arg9[%c0_24, %c0_25] : memref<128x128xbf16, #tpu.memory_space<vmem>>, vector<128x128xbf16>
      %cst_26 = arith.constant dense<0.000000e+00> : vector<128x128xf32>
      %31 = tpu.matmul %29, %30, %cst_26 {dimension_numbers = #tpu.dot_dimension_numbers<[1], [0], [0], [1], [0, 0, 1, 1], [], []>} : vector<128x128xbf16>, vector<128x128xbf16>, vector<128x128xf32> -> vector<128x128xf32>
      %c0_27 = arith.constant 0 : index
      %c0_28 = arith.constant 0 : index
      %32 = vector.load %arg10[%c0_27, %c0_28] : memref<1x128xf32, #tpu.memory_space<vmem>>, vector<1x128xf32>
      %33 = vector.broadcast %32 : vector<1x128xf32> to vector<128x128xf32>
      %34 = arith.addf %31, %33 : vector<128x128xf32>
      %c0_29 = arith.constant 0 : index
      %c0_30 = arith.constant 0 : index
      %35 = vector.load %arg11[%c0_29, %c0_30] : memref<128x128xf32, #tpu.memory_space<vmem>>, vector<128x128xf32>
      tpu.vector_store %arg11[%c0_29, %c0_30], %34 {strides = array<i32>} : memref<128x128xf32, #tpu.memory_space<vmem>>, vector<128x128xf32>,
    } else {
    }
    return
  }
  func.func @transform_0(%arg0: i32, %arg1: i32) -> (i32, i32) {
    %c0_i32 = arith.constant 0 : i32
    return %arg0, %arg1 : i32, i32
  }
  func.func @transform_1(%arg0: i32, %arg1: i32) -> (i32, i32) {
    %c0_i32 = arith.constant 0 : i32
    %c0_i32_0 = arith.constant 0 : i32
    return %arg1, %c0_i32 : i32, i32
  }
  func.func @transform_2(%arg0: i32, %arg1: i32) -> (i32, i32) {
    %c0_i32 = arith.constant 0 : i32
    %c0_i32_0 = arith.constant 0 : i32
    return %arg0, %c0_i32 : i32, i32
  }
  func.func @transform_3(%arg0: i32, %arg1: i32) -> (i32, i32) {
    %c0_i32 = arith.constant 0 : i32
    %c0_i32_0 = arith.constant 0 : i32
    %c0_i32_1 = arith.constant 0 : i32
    return %c0_i32, %c0_i32_0 : i32, i32
  }
  func.func @transform_4(%arg0: i32, %arg1: i32) -> (i32, i32) {
    %c0_i32 = arith.constant 0 : i32
    %c0_i32_0 = arith.constant 0 : i32
    %c0_i32_1 = arith.constant 0 : i32
    return %c0_i32, %c0_i32_0 : i32, i32
  }
  func.func @transform_5(%arg0: i32, %arg1: i32) -> (i32, i32) {
    %c0_i32 = arith.constant 0 : i32
    %c0_i32_0 = arith.constant 0 : i32
    %c0_i32_1 = arith.constant 0 : i32
    return %c0_i32, %c0_i32_0 : i32, i32
  }
  func.func @transform_6(%arg0: i32, %arg1: i32) -> (i32, i32) {
    %c0_i32 = arith.constant 0 : i32
    %c0_i32_0 = arith.constant 0 : i32
    %c0_i32_1 = arith.constant 0 : i32
    return %c0_i32, %c0_i32_0 : i32, i32
  }
  func.func @transform_7(%arg0: i32, %arg1: i32) -> (i32, i32) {
    %c0_i32 = arith.constant 0 : i32
    %c0_i32_0 = arith.constant 0 : i32
    %c0_i32_1 = arith.constant 0 : i32
    return %c0_i32, %c0_i32_0 : i32, i32
  }
  func.func @transform_8(%arg0: i32, %arg1: i32) -> (i32, i32) {
    %c0_i32 = arith.constant 0 : i32
    %c0_i32_0 = arith.constant 0 : i32
    %c0_i32_1 = arith.constant 0 : i32
    return %c0_i32, %c0_i32_0 : i32, i32
  }
  func.func @transform_9(%arg0: i32, %arg1: i32) -> (i32, i32) {
    %c0_i32 = arith.constant 0 : i32
    %c0_i32_0 = arith.constant 0 : i32
    return %arg0, %c0_i32 : i32, i32
  }
}

</mosaic_0001>

<llo_original>
// kernel: gin_forward.3
$region0: #{gin_forward.3}
  #allocation0 [shape = 'u32[]', space=smem, size = 0x4, offset = 0x4, fixed_abs, tag = 'smem constant byte address 0x4 - core index']
  #allocation1 [shape = 'u32[144,128]{1,0:T(1,128)}', space=vmem, size = 0x12000, scoped, tag = 'internal scratch']
  #allocation2 [shape = 'f32[128,128]{1,0:T(8,128)}', space=vmem, size = 0x10000, scoped, tag = 'scratch operand']
  %s0 = inlined_call_operand.vmem [shape: bf16[128,128], index: 0, kind: input, shape index: {}]
  %s1 = inlined_call_operand.vmem [shape: bf16[128,128], index: 1, kind: input, shape index: {}, may-alias: {1,2}]
  %s2 = inlined_call_operand.vmem [shape: bf16[128,128], index: 2, kind: input, shape index: {}, may-alias: {1,2}]
  %s3 = inlined_call_operand.vmem [shape: bf16[128,128], index: 3, kind: input, shape index: {}]
  %s4 = inlined_call_operand.vmem [shape: f32[1,128], index: 4, kind: input, shape index: {}]
  %s5 = inlined_call_operand.vmem [shape: bf16[128,128], index: 5, kind: input, shape index: {}]
  %s6 = inlined_call_operand.vmem [shape: f32[1,128], index: 6, kind: input, shape index: {}]
  %s7 = inlined_call_operand.vmem [shape: bf16[128,128], index: 7, kind: input, shape index: {}]
  %s8 = inlined_call_operand.vmem [shape: f32[1,128], index: 8, kind: input, shape index: {}]
  %s9 = inlined_call_operand.vmem [shape: f32[128,128], index: 9, kind: output, shape index: {}]
  %s10 = sld [smem:[#allocation0]]
  $region54: #{gin_forward.3} parent=0
    _
  %s12 = ssub.s32 1, %s10
  %s13 = scalar_select 0, %s12, %s10
  // Predicated region
  $region2: #{gin_forward.3} parent=0 // pred_check
    _
  $region3: #{gin_forward.3} parent=0 // pred_check_branch
    %15 = sbr.rel (0) target = $region5
  $region4: #{gin_forward.3} parent=0 // pred_region
    _
  $region5: #{gin_forward.3} parent=0 // pred_fallthru
    _
  // Predicated region
  $region6: #{gin_forward.3} parent=0 // pred_check
    _
  $region7: #{gin_forward.3} parent=0 // pred_check_branch
    %17 = sbr.rel (0) target = $region9
  $region8: #{gin_forward.3} parent=0 // pred_region
    _
  $region9: #{gin_forward.3} parent=0 // pred_fallthru
    _
  // Predicated region
  $region10: #{gin_forward.3} parent=0 // pred_check
    _
  $region11: #{gin_forward.3} parent=0 // pred_check_branch
    %19 = sbr.rel (0) target = $region13
  $region12: #{gin_forward.3} parent=0 // pred_region
    _
  $region13: #{gin_forward.3} parent=0 // pred_fallthru
    _
  // Predicated region
  $region14: #{gin_forward.3} parent=0 // pred_check
    _
  $region15: #{gin_forward.3} parent=0 // pred_check_branch
    %21 = sbr.rel (0) target = $region17
  $region16: #{gin_forward.3} parent=0 // pred_region
    _
  $region17: #{gin_forward.3} parent=0 // pred_fallthru
    _
  // Predicated region
  $region18: #{gin_forward.3} parent=0 // pred_check
    _
  $region19: #{gin_forward.3} parent=0 // pred_check_branch
    %23 = sbr.rel (0) target = $region21
  $region20: #{gin_forward.3} parent=0 // pred_region
    _
  $region21: #{gin_forward.3} parent=0 // pred_fallthru
    _
  // Predicated region
  $region22: #{gin_forward.3} parent=0 // pred_check
    _
  $region23: #{gin_forward.3} parent=0 // pred_check_branch
    %25 = sbr.rel (0) target = $region25
  $region24: #{gin_forward.3} parent=0 // pred_region
    _
  $region25: #{gin_forward.3} parent=0 // pred_fallthru
    _
  // Predicated region
  $region26: #{gin_forward.3} parent=0 // pred_check
    _
  $region27: #{gin_forward.3} parent=0 // pred_check_branch
    %27 = sbr.rel (0) target = $region29
  $region28: #{gin_forward.3} parent=0 // pred_region
    _
  $region29: #{gin_forward.3} parent=0 // pred_fallthru
    _
  // Predicated region
  $region30: #{gin_forward.3} parent=0 // pred_check
    _
  $region31: #{gin_forward.3} parent=0 // pred_check_branch
    %29 = sbr.rel (0) target = $region33
  $region32: #{gin_forward.3} parent=0 // pred_region
    _
  $region33: #{gin_forward.3} parent=0 // pred_fallthru
    _
  // Predicated region
  $region34: #{gin_forward.3} parent=0 // pred_check
    _
  $region35: #{gin_forward.3} parent=0 // pred_check_branch
    %31 = sbr.rel (0) target = $region37
  $region36: #{gin_forward.3} parent=0 // pred_region
    _
  $region37: #{gin_forward.3} parent=0 // pred_fallthru
    _
  %p33 = scmp.eq.s32.totalorder 0, 0
  // Predicated region
  $region38: #{gin_forward.3} parent=0 // pred_check
    %p34 = pneg %p33
  $region39: #{gin_forward.3} parent=0 // pred_check_branch
    %36 = sbr.rel (%p34) target = $region41
  $region40: #{gin_forward.3} parent=0 // pred_region
    %v37 = vld [vmem:[%s2] sm:$0xf]
    %v38 = vld [vmem:[%s2 + $0x4] sm:$0xf]
    %v39 = vld [vmem:[%s2 + $0x8] sm:$0xf]
    %v40 = vld [vmem:[%s2 + $0xc] sm:$0xf]
    %v41 = vld [vmem:[%s2 + $0x10] sm:$0xf]
    %v42 = vld [vmem:[%s2 + $0x14] sm:$0xf]
    %v43 = vld [vmem:[%s2 + $0x18] sm:$0xf]
    %v44 = vld [vmem:[%s2 + $0x1c] sm:$0xf]
    %v45 = vld [vmem:[%s2 + $0x20] sm:$0xf]
    %v46 = vld [vmem:[%s2 + $0x24] sm:$0xf]
    %v47 = vld [vmem:[%s2 + $0x28] sm:$0xf]
    %v48 = vld [vmem:[%s2 + $0x2c] sm:$0xf]
    %v49 = vld [vmem:[%s2 + $0x30] sm:$0xf]
    %v50 = vld [vmem:[%s2 + $0x34] sm:$0xf]
    %v51 = vld [vmem:[%s2 + $0x38] sm:$0xf]
    %v52 = vld [vmem:[%s2 + $0x3c] sm:$0xf]
    %v53 = vunpack.c.l.bf16 %v37
    %v54 = vunpack.c.l.bf16 %v38
    %v55 = vunpack.c.l.bf16 %v39
    %v56 = vunpack.c.l.bf16 %v40
    %v57 = vunpack.c.l.bf16 %v41
    %v58 = vunpack.c.l.bf16 %v42
    %v59 = vunpack.c.l.bf16 %v43
    %v60 = vunpack.c.l.bf16 %v44
    %v61 = vunpack.c.l.bf16 %v45
    %v62 = vunpack.c.l.bf16 %v46
    %v63 = vunpack.c.l.bf16 %v47
    %v64 = vunpack.c.l.bf16 %v48
    %v65 = vunpack.c.l.bf16 %v49
    %v66 = vunpack.c.l.bf16 %v50
    %v67 = vunpack.c.l.bf16 %v51
    %v68 = vunpack.c.l.bf16 %v52
    %69 = vst [vmem:[#allocation2] sm:$0xff] %v53
    %70 = vst [vmem:[#allocation2 + $0x8] sm:$0xff] %v54
    %71 = vst [vmem:[#allocation2 + $0x10] sm:$0xff] %v55
    %72 = vst [vmem:[#allocation2 + $0x18] sm:$0xff] %v56
    %73 = vst [vmem:[#allocation2 + $0x20] sm:$0xff] %v57
    %74 = vst [vmem:[#allocation2 + $0x28] sm:$0xff] %v58
    %75 = vst [vmem:[#allocation2 + $0x30] sm:$0xff] %v59
    %76 = vst [vmem:[#allocation2 + $0x38] sm:$0xff] %v60
    %77 = vst [vmem:[#allocation2 + $0x40] sm:$0xff] %v61
    %78 = vst [vmem:[#allocation2 + $0x48] sm:$0xff] %v62
    %79 = vst [vmem:[#allocation2 + $0x50] sm:$0xff] %v63
    %80 = vst [vmem:[#allocation2 + $0x58] sm:$0xff] %v64
    %81 = vst [vmem:[#allocation2 + $0x60] sm:$0xff] %v65
    %82 = vst [vmem:[#allocation2 + $0x68] sm:$0xff] %v66
    %83 = vst [vmem:[#allocation2 + $0x70] sm:$0xff] %v67
    %84 = vst [vmem:[#allocation2 + $0x78] sm:$0xff] %v68
  $region41: #{gin_forward.3} parent=0 // pred_fallthru
    _
  %v85 = vld [vmem:[#allocation2] sm:$0xff]
  %v86 = vld [vmem:[#allocation2 + $0x8] sm:$0xff]
  %v87 = vld [vmem:[#allocation2 + $0x10] sm:$0xff]
  %v88 = vld [vmem:[#allocation2 + $0x18] sm:$0xff]
  %v89 = vld [vmem:[#allocation2 + $0x20] sm:$0xff]
  %v90 = vld [vmem:[#allocation2 + $0x28] sm:$0xff]
  %v91 = vld [vmem:[#allocation2 + $0x30] sm:$0xff]
  %v92 = vld [vmem:[#allocation2 + $0x38] sm:$0xff]
  %v93 = vld [vmem:[#allocation2 + $0x40] sm:$0xff]
  %v94 = vld [vmem:[#allocation2 + $0x48] sm:$0xff]
  %v95 = vld [vmem:[#allocation2 + $0x50] sm:$0xff]
  %v96 = vld [vmem:[#allocation2 + $0x58] sm:$0xff]
  %v97 = vld [vmem:[#allocation2 + $0x60] sm:$0xff]
  %v98 = vld [vmem:[#allocation2 + $0x68] sm:$0xff]
  %v99 = vld [vmem:[#allocation2 + $0x70] sm:$0xff]
  %v100 = vld [vmem:[#allocation2 + $0x78] sm:$0xff]
  %v101 = vld [vmem:[%s0] sm:$0xf]
  %v102 = vld [vmem:[%s0 + $0x4] sm:$0xf]
  %v103 = vld [vmem:[%s0 + $0x8] sm:$0xf]
  %v104 = vld [vmem:[%s0 + $0xc] sm:$0xf]
  %v105 = vld [vmem:[%s0 + $0x10] sm:$0xf]
  %v106 = vld [vmem:[%s0 + $0x14] sm:$0xf]
  %v107 = vld [vmem:[%s0 + $0x18] sm:$0xf]
  %v108 = vld [vmem:[%s0 + $0x1c] sm:$0xf]
  %v109 = vld [vmem:[%s0 + $0x20] sm:$0xf]
  %v110 = vld [vmem:[%s0 + $0x24] sm:$0xf]
  %v111 = vld [vmem:[%s0 + $0x28] sm:$0xf]
  %v112 = vld [vmem:[%s0 + $0x2c] sm:$0xf]
  %v113 = vld [vmem:[%s0 + $0x30] sm:$0xf]
  %v114 = vld [vmem:[%s0 + $0x34] sm:$0xf]
  %v115 = vld [vmem:[%s0 + $0x38] sm:$0xf]
  %v116 = vld [vmem:[%s0 + $0x3c] sm:$0xf]
  %v117 = vld [vmem:[%s1] sm:$0xf]
  %v118 = vld [vmem:[%s1 + $0x4] sm:$0xf]
  %v119 = vld [vmem:[%s1 + $0x8] sm:$0xf]
  %v120 = vld [vmem:[%s1 + $0xc] sm:$0xf]
  %v121 = vld [vmem:[%s1 + $0x10] sm:$0xf]
  %v122 = vld [vmem:[%s1 + $0x14] sm:$0xf]
  %v123 = vld [vmem:[%s1 + $0x18] sm:$0xf]
  %v124 = vld [vmem:[%s1 + $0x1c] sm:$0xf]
  %v125 = vld [vmem:[%s1 + $0x20] sm:$0xf]
  %v126 = vld [vmem:[%s1 + $0x24] sm:$0xf]
  %v127 = vld [vmem:[%s1 + $0x28] sm:$0xf]
  %v128 = vld [vmem:[%s1 + $0x2c] sm:$0xf]
  %v129 = vld [vmem:[%s1 + $0x30] sm:$0xf]
  %v130 = vld [vmem:[%s1 + $0x34] sm:$0xf]
  %v131 = vld [vmem:[%s1 + $0x38] sm:$0xf]
  %v132 = vld [vmem:[%s1 + $0x3c] sm:$0xf]
  %v149 = vunpack.c.l.b16 %v101
  %v150 = vunpack.c.l.b16 %v102
  %v151 = vunpack.c.l.b16 %v103
  %v152 = vunpack.c.l.b16 %v104
  %v153 = vunpack.c.l.b16 %v105
  %v154 = vunpack.c.l.b16 %v106
  %v155 = vunpack.c.l.b16 %v107
  %v156 = vunpack.c.l.b16 %v108
  %v157 = vunpack.c.l.b16 %v109
  %v158 = vunpack.c.l.b16 %v110
  %v159 = vunpack.c.l.b16 %v111
  %v160 = vunpack.c.l.b16 %v112
  %v161 = vunpack.c.l.b16 %v113
  %v162 = vunpack.c.l.b16 %v114
  %v163 = vunpack.c.l.b16 %v115
  %v164 = vunpack.c.l.b16 %v116
  %v165 = vpack.c.b16 %v150, %v149
  %v166 = vpack.c.b16 %v152, %v151
  %v167 = vpack.c.b16 %v154, %v153
  %v168 = vpack.c.b16 %v156, %v155
  %v169 = vpack.c.b16 %v158, %v157
  %v170 = vpack.c.b16 %v160, %v159
  %v171 = vpack.c.b16 %v162, %v161
  %v172 = vpack.c.b16 %v164, %v163
  %v197 = vunpack.c.l.b16 %v117
  %v198 = vunpack.c.l.b16 %v118
  %v199 = vunpack.c.l.b16 %v119
  %v200 = vunpack.c.l.b16 %v120
  %v201 = vunpack.c.l.b16 %v121
  %v202 = vunpack.c.l.b16 %v122
  %v203 = vunpack.c.l.b16 %v123
  %v204 = vunpack.c.l.b16 %v124
  %v205 = vunpack.c.l.b16 %v125
  %v206 = vunpack.c.l.b16 %v126
  %v207 = vunpack.c.l.b16 %v127
  %v208 = vunpack.c.l.b16 %v128
  %v209 = vunpack.c.l.b16 %v129
  %v210 = vunpack.c.l.b16 %v130
  %v211 = vunpack.c.l.b16 %v131
  %v212 = vunpack.c.l.b16 %v132
  %v213 = vpack.c.b16 %v198, %v197
  %v214 = vpack.c.b16 %v200, %v199
  %v215 = vpack.c.b16 %v202, %v201
  %v216 = vpack.c.b16 %v204, %v203
  %v217 = vpack.c.b16 %v206, %v205
  %v218 = vpack.c.b16 %v208, %v207
  %v219 = vpack.c.b16 %v210, %v209
  %v220 = vpack.c.b16 %v212, %v211
  %229 = vmatprep.subr.bf16.mxu0 0
  %230 = vmatpush1.bf16.msra.mxu0 %v213
  %231 = vmatprep.subr.bf16.mxu0 0
  %232 = vmatpush1.bf16.msra.mxu0 %v214
  %233 = vmatprep.subr.bf16.mxu0 0
  %234 = vmatpush1.bf16.msra.mxu0 %v215
  %235 = vmatprep.subr.bf16.mxu0 0
  %236 = vmatpush1.bf16.msra.mxu0 %v216
  %237 = vmatprep.subr.bf16.mxu0 0
  %238 = vmatpush1.bf16.msra.mxu0 %v217
  %239 = vmatprep.subr.bf16.mxu0 0
  %240 = vmatpush1.bf16.msra.mxu0 %v218
  %241 = vmatprep.subr.bf16.mxu0 0
  %242 = vmatpush1.bf16.msra.mxu0 %v219
  %243 = vmatprep.subr.bf16.mxu0 0
  %244 = vmatpush1.bf16.msra.mxu0 %v220
  %245 = vmatprep.subr.bf16.mxu0 0
  %246 = vmatpush1.bf16.msra.mxu0 0
  %247 = vmatprep.subr.bf16.mxu0 0
  %248 = vmatpush1.bf16.msra.mxu0 0
  %249 = vmatprep.subr.bf16.mxu0 0
  %250 = vmatpush1.bf16.msra.mxu0 0
  %251 = vmatprep.subr.bf16.mxu0 0
  %252 = vmatpush1.bf16.msra.mxu0 0
  %253 = vmatprep.subr.bf16.mxu0 0
  %254 = vmatpush1.bf16.msra.mxu0 0
  %255 = vmatprep.subr.bf16.mxu0 0
  %256 = vmatpush1.bf16.msra.mxu0 0
  %257 = vmatprep.subr.bf16.mxu0 0
  %258 = vmatpush1.bf16.msra.mxu0 0
  %259 = vmatprep.subr.bf16.mxu0 0
  %260 = vmatpush1.bf16.msra.mxu0 0
  %261 = vmatprep.mubr.bf16.mxu0 0
  %262 = vmatmul.mubr.bf16.gmra.mrb[0].mxu0 %v165
  %v263 = vpop.f32.mrb[0].mxu0
  %v264 = vadd.f32 0.0, %v263
  %v265 = vpop.f32.mrb[0].mxu0
  %v266 = vpop.f32.mrb[0].mxu0
  %v267 = vadd.f32 0.0, %v266
  %v268 = vpop.f32.mrb[0].mxu0
  %269 = vmatprep.mubr.bf16.mxu0 0
  %270 = vmatmul.mubr.bf16.gmra.mrb[0].mxu0 %v166
  %v271 = vpop.f32.mrb[0].mxu0
  %v272 = vadd.f32 0.0, %v271
  %v273 = vpop.f32.mrb[0].mxu0
  %v274 = vpop.f32.mrb[0].mxu0
  %v275 = vadd.f32 0.0, %v274
  %v276 = vpop.f32.mrb[0].mxu0
  %277 = vmatprep.mubr.bf16.mxu0 0
  %278 = vmatmul.mubr.bf16.gmra.mrb[0].mxu0 %v167
  %v279 = vpop.f32.mrb[0].mxu0
  %v280 = vadd.f32 0.0, %v279
  %v281 = vpop.f32.mrb[0].mxu0
  %v282 = vpop.f32.mrb[0].mxu0
  %v283 = vadd.f32 0.0, %v282
  %v284 = vpop.f32.mrb[0].mxu0
  %285 = vmatprep.mubr.bf16.mxu0 0
  %286 = vmatmul.mubr.bf16.gmra.mrb[0].mxu0 %v168
  %v287 = vpop.f32.mrb[0].mxu0
  %v288 = vadd.f32 0.0, %v287
  %v289 = vpop.f32.mrb[0].mxu0
  %v290 = vpop.f32.mrb[0].mxu0
  %v291 = vadd.f32 0.0, %v290
  %v292 = vpop.f32.mrb[0].mxu0
  %293 = vmatprep.mubr.bf16.mxu0 0
  %294 = vmatmul.mubr.bf16.gmra.mrb[0].mxu0 %v169
  %v295 = vpop.f32.mrb[0].mxu0
  %v296 = vadd.f32 0.0, %v295
  %v297 = vpop.f32.mrb[0].mxu0
  %v298 = vpop.f32.mrb[0].mxu0
  %v299 = vadd.f32 0.0, %v298
  %v300 = vpop.f32.mrb[0].mxu0
  %301 = vmatprep.mubr.bf16.mxu0 0
  %302 = vmatmul.mubr.bf16.gmra.mrb[0].mxu0 %v170
  %v303 = vpop.f32.mrb[0].mxu0
  %v304 = vadd.f32 0.0, %v303
  %v305 = vpop.f32.mrb[0].mxu0
  %v306 = vpop.f32.mrb[0].mxu0
  %v307 = vadd.f32 0.0, %v306
  %v308 = vpop.f32.mrb[0].mxu0
  %309 = vmatprep.mubr.bf16.mxu0 0
  %310 = vmatmul.mubr.bf16.gmra.mrb[0].mxu0 %v171
  %v311 = vpop.f32.mrb[0].mxu0
  %v312 = vadd.f32 0.0, %v311
  %v313 = vpop.f32.mrb[0].mxu0
  %v314 = vpop.f32.mrb[0].mxu0
  %v315 = vadd.f32 0.0, %v314
  %v316 = vpop.f32.mrb[0].mxu0
  %317 = vmatprep.mubr.bf16.mxu0 0
  %318 = vmatmul.mubr.bf16.gmra.mrb[0].mxu0 %v172
  %v319 = vpop.f32.mrb[0].mxu0
  %v320 = vadd.f32 0.0, %v319
  %v321 = vpop.f32.mrb[0].mxu0
  %v322 = vpop.f32.mrb[0].mxu0
  %v323 = vadd.f32 0.0, %v322
  %v324 = vpop.f32.mrb[0].mxu0
  %325 = vdwg.mxu0
  %v326 = vadd.f32 %v85, %v264
  %v327 = vadd.f32 %v86, %v267
  %v328 = vadd.f32 %v87, %v272
  %v329 = vadd.f32 %v88, %v275
  %v330 = vadd.f32 %v89, %v280
  %v331 = vadd.f32 %v90, %v283
  %v332 = vadd.f32 %v91, %v288
  %v333 = vadd.f32 %v92, %v291
  %v334 = vadd.f32 %v93, %v296
  %v335 = vadd.f32 %v94, %v299
  %v336 = vadd.f32 %v95, %v304
  %v337 = vadd.f32 %v96, %v307
  %v338 = vadd.f32 %v97, %v312
  %v339 = vadd.f32 %v98, %v315
  %v340 = vadd.f32 %v99, %v320
  %v341 = vadd.f32 %v100, %v323
  %342 = vst [vmem:[#allocation2] sm:$0xff] %v326
  %343 = vst [vmem:[#allocation2 + $0x8] sm:$0xff] %v327
  %344 = vst [vmem:[#allocation2 + $0x10] sm:$0xff] %v328
  %345 = vst [vmem:[#allocation2 + $0x18] sm:$0xff] %v329
  %346 = vst [vmem:[#allocation2 + $0x20] sm:$0xff] %v330
  %347 = vst [vmem:[#allocation2 + $0x28] sm:$0xff] %v331
  %348 = vst [vmem:[#allocation2 + $0x30] sm:$0xff] %v332
  %349 = vst [vmem:[#allocation2 + $0x38] sm:$0xff] %v333
  %350 = vst [vmem:[#allocation2 + $0x40] sm:$0xff] %v334
  %351 = vst [vmem:[#allocation2 + $0x48] sm:$0xff] %v335
  %352 = vst [vmem:[#allocation2 + $0x50] sm:$0xff] %v336
  %353 = vst [vmem:[#allocation2 + $0x58] sm:$0xff] %v337
  %354 = vst [vmem:[#allocation2 + $0x60] sm:$0xff] %v338
  %355 = vst [vmem:[#allocation2 + $0x68] sm:$0xff] %v339
  %356 = vst [vmem:[#allocation2 + $0x70] sm:$0xff] %v340
  %357 = vst [vmem:[#allocation2 + $0x78] sm:$0xff] %v341
  // Predicated region
  $region42: #{gin_forward.3} parent=0 // pred_check
    %p358 = pneg %p33
  $region43: #{gin_forward.3} parent=0 // pred_check_branch
    %360 = sbr.rel (%p358) target = $region45
  $region44: #{gin_forward.3} parent=0 // pred_region
    %v361 = vld [vmem:[#allocation2] sm:$0xff]
    %v362 = vld [vmem:[#allocation2 + $0x8] sm:$0xff]
    %v363 = vld [vmem:[#allocation2 + $0x10] sm:$0xff]
    %v364 = vld [vmem:[#allocation2 + $0x18] sm:$0xff]
    %v365 = vld [vmem:[#allocation2 + $0x20] sm:$0xff]
    %v366 = vld [vmem:[#allocation2 + $0x28] sm:$0xff]
    %v367 = vld [vmem:[#allocation2 + $0x30] sm:$0xff]
    %v368 = vld [vmem:[#allocation2 + $0x38] sm:$0xff]
    %v369 = vld [vmem:[#allocation2 + $0x40] sm:$0xff]
    %v370 = vld [vmem:[#allocation2 + $0x48] sm:$0xff]
    %v371 = vld [vmem:[#allocation2 + $0x50] sm:$0xff]
    %v372 = vld [vmem:[#allocation2 + $0x58] sm:$0xff]
    %v373 = vld [vmem:[#allocation2 + $0x60] sm:$0xff]
    %v374 = vld [vmem:[#allocation2 + $0x68] sm:$0xff]
    %v375 = vld [vmem:[#allocation2 + $0x70] sm:$0xff]
    %v376 = vld [vmem:[#allocation2 + $0x78] sm:$0xff]
    %v377 = vpack.c.bf16 %v362, %v361
    %v378 = vpack.c.bf16 %v364, %v363
    %v379 = vpack.c.bf16 %v366, %v365
    %v380 = vpack.c.bf16 %v368, %v367
    %v381 = vpack.c.bf16 %v370, %v369
    %v382 = vpack.c.bf16 %v372, %v371
    %v383 = vpack.c.bf16 %v374, %v373
    %v384 = vpack.c.bf16 %v376, %v375
    %v385 = vld [vmem:[%s3] sm:$0xf]
    %v386 = vld [vmem:[%s3 + $0x4] sm:$0xf]
    %v387 = vld [vmem:[%s3 + $0x8] sm:$0xf]
    %v388 = vld [vmem:[%s3 + $0xc] sm:$0xf]
    %v389 = vld [vmem:[%s3 + $0x10] sm:$0xf]
    %v390 = vld [vmem:[%s3 + $0x14] sm:$0xf]
    %v391 = vld [vmem:[%s3 + $0x18] sm:$0xf]
    %v392 = vld [vmem:[%s3 + $0x1c] sm:$0xf]
    %v393 = vld [vmem:[%s3 + $0x20] sm:$0xf]
    %v394 = vld [vmem:[%s3 + $0x24] sm:$0xf]
    %v395 = vld [vmem:[%s3 + $0x28] sm:$0xf]
    %v396 = vld [vmem:[%s3 + $0x2c] sm:$0xf]
    %v397 = vld [vmem:[%s3 + $0x30] sm:$0xf]
    %v398 = vld [vmem:[%s3 + $0x34] sm:$0xf]
    %v399 = vld [vmem:[%s3 + $0x38] sm:$0xf]
    %v400 = vld [vmem:[%s3 + $0x3c] sm:$0xf]
    %v401 = vld [vmem:[%s4] sm:$0x1]
    %v403 = vlaneseq
    %v404 = vshrl.u32 %v403, 7
    %v405 = vsub.s32 0, %v404
    %v406 = vrot.slane %v401, %v405
    %v424 = vunpack.c.l.b16 %v385
    %v425 = vunpack.c.l.b16 %v386
    %v426 = vunpack.c.l.b16 %v387
    %v427 = vunpack.c.l.b16 %v388
    %v428 = vunpack.c.l.b16 %v389
    %v429 = vunpack.c.l.b16 %v390
    %v430 = vunpack.c.l.b16 %v391
    %v431 = vunpack.c.l.b16 %v392
    %v432 = vunpack.c.l.b16 %v393
    %v433 = vunpack.c.l.b16 %v394
    %v434 = vunpack.c.l.b16 %v395
    %v435 = vunpack.c.l.b16 %v396
    %v436 = vunpack.c.l.b16 %v397
    %v437 = vunpack.c.l.b16 %v398
    %v438 = vunpack.c.l.b16 %v399
    %v439 = vunpack.c.l.b16 %v400
    %v440 = vpack.c.b16 %v425, %v424
    %v441 = vpack.c.b16 %v427, %v426
    %v442 = vpack.c.b16 %v429, %v428
    %v443 = vpack.c.b16 %v431, %v430
    %v444 = vpack.c.b16 %v433, %v432
    %v445 = vpack.c.b16 %v435, %v434
    %v446 = vpack.c.b16 %v437, %v436
    %v447 = vpack.c.b16 %v439, %v438
    %456 = vmatprep.subr.bf16.mxu0 0
    %457 = vmatpush1.bf16.msra.mxu0 %v440
    %458 = vmatprep.subr.bf16.mxu0 0
    %459 = vmatpush1.bf16.msra.mxu0 %v441
    %460 = vmatprep.subr.bf16.mxu0 0
    %461 = vmatpush1.bf16.msra.mxu0 %v442
    %462 = vmatprep.subr.bf16.mxu0 0
    %463 = vmatpush1.bf16.msra.mxu0 %v443
    %464 = vmatprep.subr.bf16.mxu0 0
    %465 = vmatpush1.bf16.msra.mxu0 %v444
    %466 = vmatprep.subr.bf16.mxu0 0
    %467 = vmatpush1.bf16.msra.mxu0 %v445
    %468 = vmatprep.subr.bf16.mxu0 0
    %469 = vmatpush1.bf16.msra.mxu0 %v446
    %470 = vmatprep.subr.bf16.mxu0 0
    %471 = vmatpush1.bf16.msra.mxu0 %v447
    %472 = vmatprep.subr.bf16.mxu0 0
    %473 = vmatpush1.bf16.msra.mxu0 0
    %474 = vmatprep.subr.bf16.mxu0 0
    %475 = vmatpush1.bf16.msra.mxu0 0
    %476 = vmatprep.subr.bf16.mxu0 0
    %477 = vmatpush1.bf16.msra.mxu0 0
    %478 = vmatprep.subr.bf16.mxu0 0
    %479 = vmatpush1.bf16.msra.mxu0 0
    %480 = vmatprep.subr.bf16.mxu0 0
    %481 = vmatpush1.bf16.msra.mxu0 0
    %482 = vmatprep.subr.bf16.mxu0 0
    %483 = vmatpush1.bf16.msra.mxu0 0
    %484 = vmatprep.subr.bf16.mxu0 0
    %485 = vmatpush1.bf16.msra.mxu0 0
    %486 = vmatprep.subr.bf16.mxu0 0
    %487 = vmatpush1.bf16.msra.mxu0 0
    %488 = vmatprep.mubr.bf16.mxu0 0
    %489 = vmatmul.mubr.bf16.gmra.mrb[0].mxu0 %v377
    %v490 = vpop.f32.mrb[0].mxu0
    %v491 = vadd.f32 %v406, %v490
    %v492 = vpop.f32.mrb[0].mxu0
    %v493 = vpop.f32.mrb[0].mxu0
    %v494 = vadd.f32 %v406, %v493
    %v495 = vpop.f32.mrb[0].mxu0
    %496 = vmatprep.mubr.bf16.mxu0 0
    %497 = vmatmul.mubr.bf16.gmra.mrb[0].mxu0 %v378
    %v498 = vpop.f32.mrb[0].mxu0
    %v499 = vadd.f32 %v406, %v498
    %v500 = vpop.f32.mrb[0].mxu0
    %v501 = vpop.f32.mrb[0].mxu0
    %v502 = vadd.f32 %v406, %v501
    %v503 = vpop.f32.mrb[0].mxu0
    %504 = vmatprep.mubr.bf16.mxu0 0
    %505 = vmatmul.mubr.bf16.gmra.mrb[0].mxu0 %v379
    %v506 = vpop.f32.mrb[0].mxu0
    %v507 = vadd.f32 %v406, %v506
    %v508 = vpop.f32.mrb[0].mxu0
    %v509 = vpop.f32.mrb[0].mxu0
    %v510 = vadd.f32 %v406, %v509
    %v511 = vpop.f32.mrb[0].mxu0
    %512 = vmatprep.mubr.bf16.mxu0 0
    %513 = vmatmul.mubr.bf16.gmra.mrb[0].mxu0 %v380
    %v514 = vpop.f32.mrb[0].mxu0
    %v515 = vadd.f32 %v406, %v514
    %v516 = vpop.f32.mrb[0].mxu0
    %v517 = vpop.f32.mrb[0].mxu0
    %v518 = vadd.f32 %v406, %v517
    %v519 = vpop.f32.mrb[0].mxu0
    %520 = vmatprep.mubr.bf16.mxu0 0
    %521 = vmatmul.mubr.bf16.gmra.mrb[0].mxu0 %v381
    %v522 = vpop.f32.mrb[0].mxu0
    %v523 = vadd.f32 %v406, %v522
    %v524 = vpop.f32.mrb[0].mxu0
    %v525 = vpop.f32.mrb[0].mxu0
    %v526 = vadd.f32 %v406, %v525
    %v527 = vpop.f32.mrb[0].mxu0
    %528 = vmatprep.mubr.bf16.mxu0 0
    %529 = vmatmul.mubr.bf16.gmra.mrb[0].mxu0 %v382
    %v530 = vpop.f32.mrb[0].mxu0
    %v531 = vadd.f32 %v406, %v530
    %v532 = vpop.f32.mrb[0].mxu0
    %v533 = vpop.f32.mrb[0].mxu0
    %v534 = vadd.f32 %v406, %v533
    %v535 = vpop.f32.mrb[0].mxu0
    %536 = vmatprep.mubr.bf16.mxu0 0
    %537 = vmatmul.mubr.bf16.gmra.mrb[0].mxu0 %v383
    %v538 = vpop.f32.mrb[0].mxu0
    %v539 = vadd.f32 %v406, %v538
    %v540 = vpop.f32.mrb[0].mxu0
    %v541 = vpop.f32.mrb[0].mxu0
    %v542 = vadd.f32 %v406, %v541
    %v543 = vpop.f32.mrb[0].mxu0
    %544 = vmatprep.mubr.bf16.mxu0 0
    %545 = vmatmul.mubr.bf16.gmra.mrb[0].mxu0 %v384
    %v546 = vpop.f32.mrb[0].mxu0
    %v547 = vadd.f32 %v406, %v546
    %v548 = vpop.f32.mrb[0].mxu0
    %v549 = vpop.f32.mrb[0].mxu0
    %v550 = vadd.f32 %v406, %v549
    %v551 = vpop.f32.mrb[0].mxu0
    %552 = vdwg.mxu0
    %v553 = vmax.f32 %v491, 0.0
    %v554 = vmax.f32 %v494, 0.0
    %v555 = vmax.f32 %v499, 0.0
    %v556 = vmax.f32 %v502, 0.0
    %v557 = vmax.f32 %v507, 0.0
    %v558 = vmax.f32 %v510, 0.0
    %v559 = vmax.f32 %v515, 0.0
    %v560 = vmax.f32 %v518, 0.0
    %v561 = vmax.f32 %v523, 0.0
    %v562 = vmax.f32 %v526, 0.0
    %v563 = vmax.f32 %v531, 0.0
    %v564 = vmax.f32 %v534, 0.0
    %v565 = vmax.f32 %v539, 0.0
    %v566 = vmax.f32 %v542, 0.0
    %v567 = vmax.f32 %v547, 0.0
    %v568 = vmax.f32 %v550, 0.0
    %v569 = vpack.c.bf16 %v554, %v553
    %v570 = vpack.c.bf16 %v556, %v555
    %v571 = vpack.c.bf16 %v558, %v557
    %v572 = vpack.c.bf16 %v560, %v559
    %v573 = vpack.c.bf16 %v562, %v561
    %v574 = vpack.c.bf16 %v564, %v563
    %v575 = vpack.c.bf16 %v566, %v565
    %v576 = vpack.c.bf16 %v568, %v567
    %v577 = vld [vmem:[%s5] sm:$0xf]
    %v578 = vld [vmem:[%s5 + $0x4] sm:$0xf]
    %v579 = vld [vmem:[%s5 + $0x8] sm:$0xf]
    %v580 = vld [vmem:[%s5 + $0xc] sm:$0xf]
    %v581 = vld [vmem:[%s5 + $0x10] sm:$0xf]
    %v582 = vld [vmem:[%s5 + $0x14] sm:$0xf]
    %v583 = vld [vmem:[%s5 + $0x18] sm:$0xf]
    %v584 = vld [vmem:[%s5 + $0x1c] sm:$0xf]
    %v585 = vld [vmem:[%s5 + $0x20] sm:$0xf]
    %v586 = vld [vmem:[%s5 + $0x24] sm:$0xf]
    %v587 = vld [vmem:[%s5 + $0x28] sm:$0xf]
    %v588 = vld [vmem:[%s5 + $0x2c] sm:$0xf]
    %v589 = vld [vmem:[%s5 + $0x30] sm:$0xf]
    %v590 = vld [vmem:[%s5 + $0x34] sm:$0xf]
    %v591 = vld [vmem:[%s5 + $0x38] sm:$0xf]
    %v592 = vld [vmem:[%s5 + $0x3c] sm:$0xf]
    %v593 = vld [vmem:[%s6] sm:$0x1]
    %v595 = vlaneseq
    %v596 = vshrl.u32 %v595, 7
    %v597 = vsub.s32 0, %v596
    %v598 = vrot.slane %v593, %v597
    %v616 = vunpack.c.l.b16 %v577
    %v617 = vunpack.c.l.b16 %v578
    %v618 = vunpack.c.l.b16 %v579
    %v619 = vunpack.c.l.b16 %v580
    %v620 = vunpack.c.l.b16 %v581
    %v621 = vunpack.c.l.b16 %v582
    %v622 = vunpack.c.l.b16 %v583
    %v623 = vunpack.c.l.b16 %v584
    %v624 = vunpack.c.l.b16 %v585
    %v625 = vunpack.c.l.b16 %v586
    %v626 = vunpack.c.l.b16 %v587
    %v627 = vunpack.c.l.b16 %v588
    %v628 = vunpack.c.l.b16 %v589
    %v629 = vunpack.c.l.b16 %v590
    %v630 = vunpack.c.l.b16 %v591
    %v631 = vunpack.c.l.b16 %v592
    %v632 = vpack.c.b16 %v617, %v616
    %v633 = vpack.c.b16 %v619, %v618
    %v634 = vpack.c.b16 %v621, %v620
    %v635 = vpack.c.b16 %v623, %v622
    %v636 = vpack.c.b16 %v625, %v624
    %v637 = vpack.c.b16 %v627, %v626
    %v638 = vpack.c.b16 %v629, %v628
    %v639 = vpack.c.b16 %v631, %v630
    %648 = vmatprep.subr.bf16.mxu0 0
    %649 = vmatpush1.bf16.msra.mxu0 %v632
    %650 = vmatprep.subr.bf16.mxu0 0
    %651 = vmatpush1.bf16.msra.mxu0 %v633
    %652 = vmatprep.subr.bf16.mxu0 0
    %653 = vmatpush1.bf16.msra.mxu0 %v634
    %654 = vmatprep.subr.bf16.mxu0 0
    %655 = vmatpush1.bf16.msra.mxu0 %v635
    %656 = vmatprep.subr.bf16.mxu0 0
    %657 = vmatpush1.bf16.msra.mxu0 %v636
    %658 = vmatprep.subr.bf16.mxu0 0
    %659 = vmatpush1.bf16.msra.mxu0 %v637
    %660 = vmatprep.subr.bf16.mxu0 0
    %661 = vmatpush1.bf16.msra.mxu0 %v638
    %662 = vmatprep.subr.bf16.mxu0 0
    %663 = vmatpush1.bf16.msra.mxu0 %v639
    %664 = vmatprep.subr.bf16.mxu0 0
    %665 = vmatpush1.bf16.msra.mxu0 0
    %666 = vmatprep.subr.bf16.mxu0 0
    %667 = vmatpush1.bf16.msra.mxu0 0
    %668 = vmatprep.subr.bf16.mxu0 0
    %669 = vmatpush1.bf16.msra.mxu0 0
    %670 = vmatprep.subr.bf16.mxu0 0
    %671 = vmatpush1.bf16.msra.mxu0 0
    %672 = vmatprep.subr.bf16.mxu0 0
    %673 = vmatpush1.bf16.msra.mxu0 0
    %674 = vmatprep.subr.bf16.mxu0 0
    %675 = vmatpush1.bf16.msra.mxu0 0
    %676 = vmatprep.subr.bf16.mxu0 0
    %677 = vmatpush1.bf16.msra.mxu0 0
    %678 = vmatprep.subr.bf16.mxu0 0
    %679 = vmatpush1.bf16.msra.mxu0 0
    %680 = vmatprep.mubr.bf16.mxu0 0
    %681 = vmatmul.mubr.bf16.gmra.mrb[0].mxu0 %v569
    %v682 = vpop.f32.mrb[0].mxu0
    %v683 = vadd.f32 %v598, %v682
    %v684 = vpop.f32.mrb[0].mxu0
    %v685 = vpop.f32.mrb[0].mxu0
    %v686 = vadd.f32 %v598, %v685
    %v687 = vpop.f32.mrb[0].mxu0
    %688 = vmatprep.mubr.bf16.mxu0 0
    %689 = vmatmul.mubr.bf16.gmra.mrb[0].mxu0 %v570
    %v690 = vpop.f32.mrb[0].mxu0
    %v691 = vadd.f32 %v598, %v690
    %v692 = vpop.f32.mrb[0].mxu0
    %v693 = vpop.f32.mrb[0].mxu0
    %v694 = vadd.f32 %v598, %v693
    %v695 = vpop.f32.mrb[0].mxu0
    %696 = vmatprep.mubr.bf16.mxu0 0
    %697 = vmatmul.mubr.bf16.gmra.mrb[0].mxu0 %v571
    %v698 = vpop.f32.mrb[0].mxu0
    %v699 = vadd.f32 %v598, %v698
    %v700 = vpop.f32.mrb[0].mxu0
    %v701 = vpop.f32.mrb[0].mxu0
    %v702 = vadd.f32 %v598, %v701
    %v703 = vpop.f32.mrb[0].mxu0
    %704 = vmatprep.mubr.bf16.mxu0 0
    %705 = vmatmul.mubr.bf16.gmra.mrb[0].mxu0 %v572
    %v706 = vpop.f32.mrb[0].mxu0
    %v707 = vadd.f32 %v598, %v706
    %v708 = vpop.f32.mrb[0].mxu0
    %v709 = vpop.f32.mrb[0].mxu0
    %v710 = vadd.f32 %v598, %v709
    %v711 = vpop.f32.mrb[0].mxu0
    %712 = vmatprep.mubr.bf16.mxu0 0
    %713 = vmatmul.mubr.bf16.gmra.mrb[0].mxu0 %v573
    %v714 = vpop.f32.mrb[0].mxu0
    %v715 = vadd.f32 %v598, %v714
    %v716 = vpop.f32.mrb[0].mxu0
    %v717 = vpop.f32.mrb[0].mxu0
    %v718 = vadd.f32 %v598, %v717
    %v719 = vpop.f32.mrb[0].mxu0
    %720 = vmatprep.mubr.bf16.mxu0 0
    %721 = vmatmul.mubr.bf16.gmra.mrb[0].mxu0 %v574
    %v722 = vpop.f32.mrb[0].mxu0
    %v723 = vadd.f32 %v598, %v722
    %v724 = vpop.f32.mrb[0].mxu0
    %v725 = vpop.f32.mrb[0].mxu0
    %v726 = vadd.f32 %v598, %v725
    %v727 = vpop.f32.mrb[0].mxu0
    %728 = vmatprep.mubr.bf16.mxu0 0
    %729 = vmatmul.mubr.bf16.gmra.mrb[0].mxu0 %v575
    %v730 = vpop.f32.mrb[0].mxu0
    %v731 = vadd.f32 %v598, %v730
    %v732 = vpop.f32.mrb[0].mxu0
    %v733 = vpop.f32.mrb[0].mxu0
    %v734 = vadd.f32 %v598, %v733
    %v735 = vpop.f32.mrb[0].mxu0
    %736 = vmatprep.mubr.bf16.mxu0 0
    %737 = vmatmul.mubr.bf16.gmra.mrb[0].mxu0 %v576
    %v738 = vpop.f32.mrb[0].mxu0
    %v739 = vadd.f32 %v598, %v738
    %v740 = vpop.f32.mrb[0].mxu0
    %v741 = vpop.f32.mrb[0].mxu0
    %v742 = vadd.f32 %v598, %v741
    %v743 = vpop.f32.mrb[0].mxu0
    %744 = vdwg.mxu0
    %v745 = vmax.f32 %v683, 0.0
    %v746 = vmax.f32 %v686, 0.0
    %v747 = vmax.f32 %v691, 0.0
    %v748 = vmax.f32 %v694, 0.0
    %v749 = vmax.f32 %v699, 0.0
    %v750 = vmax.f32 %v702, 0.0
    %v751 = vmax.f32 %v707, 0.0
    %v752 = vmax.f32 %v710, 0.0
    %v753 = vmax.f32 %v715, 0.0
    %v754 = vmax.f32 %v718, 0.0
    %v755 = vmax.f32 %v723, 0.0
    %v756 = vmax.f32 %v726, 0.0
    %v757 = vmax.f32 %v731, 0.0
    %v758 = vmax.f32 %v734, 0.0
    %v759 = vmax.f32 %v739, 0.0
    %v760 = vmax.f32 %v742, 0.0
    %v761 = vpack.c.bf16 %v746, %v745
    %v762 = vpack.c.bf16 %v748, %v747
    %v763 = vpack.c.bf16 %v750, %v749
    %v764 = vpack.c.bf16 %v752, %v751
    %v765 = vpack.c.bf16 %v754, %v753
    %v766 = vpack.c.bf16 %v756, %v755
    %v767 = vpack.c.bf16 %v758, %v757
    %v768 = vpack.c.bf16 %v760, %v759
    %v769 = vld [vmem:[%s7] sm:$0xf]
    %v770 = vld [vmem:[%s7 + $0x4] sm:$0xf]
    %v771 = vld [vmem:[%s7 + $0x8] sm:$0xf]
    %v772 = vld [vmem:[%s7 + $0xc] sm:$0xf]
    %v773 = vld [vmem:[%s7 + $0x10] sm:$0xf]
    %v774 = vld [vmem:[%s7 + $0x14] sm:$0xf]
    %v775 = vld [vmem:[%s7 + $0x18] sm:$0xf]
    %v776 = vld [vmem:[%s7 + $0x1c] sm:$0xf]
    %v777 = vld [vmem:[%s7 + $0x20] sm:$0xf]
    %v778 = vld [vmem:[%s7 + $0x24] sm:$0xf]
    %v779 = vld [vmem:[%s7 + $0x28] sm:$0xf]
    %v780 = vld [vmem:[%s7 + $0x2c] sm:$0xf]
    %v781 = vld [vmem:[%s7 + $0x30] sm:$0xf]
    %v782 = vld [vmem:[%s7 + $0x34] sm:$0xf]
    %v783 = vld [vmem:[%s7 + $0x38] sm:$0xf]
    %v784 = vld [vmem:[%s7 + $0x3c] sm:$0xf]
    %v785 = vld [vmem:[%s8] sm:$0x1]
    %v787 = vlaneseq
    %v788 = vshrl.u32 %v787, 7
    %v789 = vsub.s32 0, %v788
    %v790 = vrot.slane %v785, %v789
    %v808 = vunpack.c.l.b16 %v769
    %v809 = vunpack.c.l.b16 %v770
    %v810 = vunpack.c.l.b16 %v771
    %v811 = vunpack.c.l.b16 %v772
    %v812 = vunpack.c.l.b16 %v773
    %v813 = vunpack.c.l.b16 %v774
    %v814 = vunpack.c.l.b16 %v775
    %v815 = vunpack.c.l.b16 %v776
    %v816 = vunpack.c.l.b16 %v777
    %v817 = vunpack.c.l.b16 %v778
    %v818 = vunpack.c.l.b16 %v779
    %v819 = vunpack.c.l.b16 %v780
    %v820 = vunpack.c.l.b16 %v781
    %v821 = vunpack.c.l.b16 %v782
    %v822 = vunpack.c.l.b16 %v783
    %v823 = vunpack.c.l.b16 %v784
    %v824 = vpack.c.b16 %v809, %v808
    %v825 = vpack.c.b16 %v811, %v810
    %v826 = vpack.c.b16 %v813, %v812
    %v827 = vpack.c.b16 %v815, %v814
    %v828 = vpack.c.b16 %v817, %v816
    %v829 = vpack.c.b16 %v819, %v818
    %v830 = vpack.c.b16 %v821, %v820
    %v831 = vpack.c.b16 %v823, %v822
    %840 = vmatprep.subr.bf16.mxu0 0
    %841 = vmatpush1.bf16.msra.mxu0 %v824
    %842 = vmatprep.subr.bf16.mxu0 0
    %843 = vmatpush1.bf16.msra.mxu0 %v825
    %844 = vmatprep.subr.bf16.mxu0 0
    %845 = vmatpush1.bf16.msra.mxu0 %v826
    %846 = vmatprep.subr.bf16.mxu0 0
    %847 = vmatpush1.bf16.msra.mxu0 %v827
    %848 = vmatprep.subr.bf16.mxu0 0
    %849 = vmatpush1.bf16.msra.mxu0 %v828
    %850 = vmatprep.subr.bf16.mxu0 0
    %851 = vmatpush1.bf16.msra.mxu0 %v829
    %852 = vmatprep.subr.bf16.mxu0 0
    %853 = vmatpush1.bf16.msra.mxu0 %v830
    %854 = vmatprep.subr.bf16.mxu0 0
    %855 = vmatpush1.bf16.msra.mxu0 %v831
    %856 = vmatprep.subr.bf16.mxu0 0
    %857 = vmatpush1.bf16.msra.mxu0 0
    %858 = vmatprep.subr.bf16.mxu0 0
    %859 = vmatpush1.bf16.msra.mxu0 0
    %860 = vmatprep.subr.bf16.mxu0 0
    %861 = vmatpush1.bf16.msra.mxu0 0
    %862 = vmatprep.subr.bf16.mxu0 0
    %863 = vmatpush1.bf16.msra.mxu0 0
    %864 = vmatprep.subr.bf16.mxu0 0
    %865 = vmatpush1.bf16.msra.mxu0 0
    %866 = vmatprep.subr.bf16.mxu0 0
    %867 = vmatpush1.bf16.msra.mxu0 0
    %868 = vmatprep.subr.bf16.mxu0 0
    %869 = vmatpush1.bf16.msra.mxu0 0
    %870 = vmatprep.subr.bf16.mxu0 0
    %871 = vmatpush1.bf16.msra.mxu0 0
    %872 = vmatprep.mubr.bf16.mxu0 0
    %873 = vmatmul.mubr.bf16.gmra.mrb[0].mxu0 %v761
    %v874 = vpop.f32.mrb[0].mxu0
    %v875 = vadd.f32 %v790, %v874
    %v876 = vpop.f32.mrb[0].mxu0
    %v877 = vpop.f32.mrb[0].mxu0
    %v878 = vadd.f32 %v790, %v877
    %v879 = vpop.f32.mrb[0].mxu0
    %880 = vmatprep.mubr.bf16.mxu0 0
    %881 = vmatmul.mubr.bf16.gmra.mrb[0].mxu0 %v762
    %v882 = vpop.f32.mrb[0].mxu0
    %v883 = vadd.f32 %v790, %v882
    %v884 = vpop.f32.mrb[0].mxu0
    %v885 = vpop.f32.mrb[0].mxu0
    %v886 = vadd.f32 %v790, %v885
    %v887 = vpop.f32.mrb[0].mxu0
    %888 = vmatprep.mubr.bf16.mxu0 0
    %889 = vmatmul.mubr.bf16.gmra.mrb[0].mxu0 %v763
    %v890 = vpop.f32.mrb[0].mxu0
    %v891 = vadd.f32 %v790, %v890
    %v892 = vpop.f32.mrb[0].mxu0
    %v893 = vpop.f32.mrb[0].mxu0
    %v894 = vadd.f32 %v790, %v893
    %v895 = vpop.f32.mrb[0].mxu0
    %896 = vmatprep.mubr.bf16.mxu0 0
    %897 = vmatmul.mubr.bf16.gmra.mrb[0].mxu0 %v764
    %v898 = vpop.f32.mrb[0].mxu0
    %v899 = vadd.f32 %v790, %v898
    %v900 = vpop.f32.mrb[0].mxu0
    %v901 = vpop.f32.mrb[0].mxu0
    %v902 = vadd.f32 %v790, %v901
    %v903 = vpop.f32.mrb[0].mxu0
    %904 = vmatprep.mubr.bf16.mxu0 0
    %905 = vmatmul.mubr.bf16.gmra.mrb[0].mxu0 %v765
    %v906 = vpop.f32.mrb[0].mxu0
    %v907 = vadd.f32 %v790, %v906
    %v908 = vpop.f32.mrb[0].mxu0
    %v909 = vpop.f32.mrb[0].mxu0
    %v910 = vadd.f32 %v790, %v909
    %v911 = vpop.f32.mrb[0].mxu0
    %912 = vmatprep.mubr.bf16.mxu0 0
    %913 = vmatmul.mubr.bf16.gmra.mrb[0].mxu0 %v766
    %v914 = vpop.f32.mrb[0].mxu0
    %v915 = vadd.f32 %v790, %v914
    %v916 = vpop.f32.mrb[0].mxu0
    %v917 = vpop.f32.mrb[0].mxu0
    %v918 = vadd.f32 %v790, %v917
    %v919 = vpop.f32.mrb[0].mxu0
    %920 = vmatprep.mubr.bf16.mxu0 0
    %921 = vmatmul.mubr.bf16.gmra.mrb[0].mxu0 %v767
    %v922 = vpop.f32.mrb[0].mxu0
    %v923 = vadd.f32 %v790, %v922
    %v924 = vpop.f32.mrb[0].mxu0
    %v925 = vpop.f32.mrb[0].mxu0
    %v926 = vadd.f32 %v790, %v925
    %v927 = vpop.f32.mrb[0].mxu0
    %928 = vmatprep.mubr.bf16.mxu0 0
    %929 = vmatmul.mubr.bf16.gmra.mrb[0].mxu0 %v768
    %v930 = vpop.f32.mrb[0].mxu0
    %v931 = vadd.f32 %v790, %v930
    %v932 = vpop.f32.mrb[0].mxu0
    %v933 = vpop.f32.mrb[0].mxu0
    %v934 = vadd.f32 %v790, %v933
    %v935 = vpop.f32.mrb[0].mxu0
    %936 = vdwg.mxu0
    %937 = vst [vmem:[%s9] sm:$0xff] %v875
    %938 = vst [vmem:[%s9 + $0x8] sm:$0xff] %v878
    %939 = vst [vmem:[%s9 + $0x10] sm:$0xff] %v883
    %940 = vst [vmem:[%s9 + $0x18] sm:$0xff] %v886
    %941 = vst [vmem:[%s9 + $0x20] sm:$0xff] %v891
    %942 = vst [vmem:[%s9 + $0x28] sm:$0xff] %v894
    %943 = vst [vmem:[%s9 + $0x30] sm:$0xff] %v899
    %944 = vst [vmem:[%s9 + $0x38] sm:$0xff] %v902
    %945 = vst [vmem:[%s9 + $0x40] sm:$0xff] %v907
    %946 = vst [vmem:[%s9 + $0x48] sm:$0xff] %v910
    %947 = vst [vmem:[%s9 + $0x50] sm:$0xff] %v915
    %948 = vst [vmem:[%s9 + $0x58] sm:$0xff] %v918
    %949 = vst [vmem:[%s9 + $0x60] sm:$0xff] %v923
    %950 = vst [vmem:[%s9 + $0x68] sm:$0xff] %v926
    %951 = vst [vmem:[%s9 + $0x70] sm:$0xff] %v931
    %952 = vst [vmem:[%s9 + $0x78] sm:$0xff] %v934
  $region45: #{gin_forward.3} parent=0 // pred_fallthru
    _
  // Predicated region
  $region46: #{gin_forward.3} parent=0 // pred_check
    _
  $region47: #{gin_forward.3} parent=0 // pred_check_branch
    %954 = sbr.rel (0) target = $region49
  $region48: #{gin_forward.3} parent=0 // pred_region
    _
  $region49: #{gin_forward.3} parent=0 // pred_fallthru
    _
  // Predicated region
  $region50: #{gin_forward.3} parent=0 // pred_check
    _
  $region51: #{gin_forward.3} parent=0 // pred_check_branch
    %956 = sbr.rel (0) target = $region53
  $region52: #{gin_forward.3} parent=0 // pred_region
    _
  $region53: #{gin_forward.3} parent=0 // pred_fallthru
    _

// kernel: gin_forward.2
$region0: #{gin_forward.2}
  #allocation0 [shape = 'u32[]', space=smem, size = 0x4, offset = 0x4, fixed_abs, tag = 'smem constant byte address 0x4 - core index']
  #allocation1 [shape = 'u32[144,128]{1,0:T(1,128)}', space=vmem, size = 0x12000, scoped, tag = 'internal scratch']
  #allocation2 [shape = 'f32[128,128]{1,0:T(8,128)}', space=vmem, size = 0x10000, scoped, tag = 'scratch operand']
  %s0 = inlined_call_operand.vmem [shape: bf16[128,128], index: 0, kind: input, shape index: {}]
  %s1 = inlined_call_operand.vmem [shape: bf16[128,128], index: 1, kind: input, shape index: {}, may-alias: {1,2}]
  %s2 = inlined_call_operand.vmem [shape: bf16[128,128], index: 2, kind: input, shape index: {}, may-alias: {1,2}]
  %s3 = inlined_call_operand.vmem [shape: bf16[128,128], index: 3, kind: input, shape index: {}]
  %s4 = inlined_call_operand.vmem [shape: f32[1,128], index: 4, kind: input, shape index: {}]
  %s5 = inlined_call_operand.vmem [shape: bf16[128,128], index: 5, kind: input, shape index: {}]
  %s6 = inlined_call_operand.vmem [shape: f32[1,128], index: 6, kind: input, shape index: {}]
  %s7 = inlined_call_operand.vmem [shape: bf16[128,128], index: 7, kind: output, shape index: {}]
  %s8 = sld [smem:[#allocation0]]
  $region46: #{gin_forward.2} parent=0
    _
  %s10 = ssub.s32 1, %s8
  %s11 = scalar_select 0, %s10, %s8
  // Predicated region
  $region2: #{gin_forward.2} parent=0 // pred_check
    _
  $region3: #{gin_forward.2} parent=0 // pred_check_branch
    %13 = sbr.rel (0) target = $region5
  $region4: #{gin_forward.2} parent=0 // pred_region
    _
  $region5: #{gin_forward.2} parent=0 // pred_fallthru
    _
  // Predicated region
  $region6: #{gin_forward.2} parent=0 // pred_check
    _
  $region7: #{gin_forward.2} parent=0 // pred_check_branch
    %15 = sbr.rel (0) target = $region9
  $region8: #{gin_forward.2} parent=0 // pred_region
    _
  $region9: #{gin_forward.2} parent=0 // pred_fallthru
    _
  // Predicated region
  $region10: #{gin_forward.2} parent=0 // pred_check
    _
  $region11: #{gin_forward.2} parent=0 // pred_check_branch
    %17 = sbr.rel (0) target = $region13
  $region12: #{gin_forward.2} parent=0 // pred_region
    _
  $region13: #{gin_forward.2} parent=0 // pred_fallthru
    _
  // Predicated region
  $region14: #{gin_forward.2} parent=0 // pred_check
    _
  $region15: #{gin_forward.2} parent=0 // pred_check_branch
    %19 = sbr.rel (0) target = $region17
  $region16: #{gin_forward.2} parent=0 // pred_region
    _
  $region17: #{gin_forward.2} parent=0 // pred_fallthru
    _
  // Predicated region
  $region18: #{gin_forward.2} parent=0 // pred_check
    _
  $region19: #{gin_forward.2} parent=0 // pred_check_branch
    %21 = sbr.rel (0) target = $region21
  $region20: #{gin_forward.2} parent=0 // pred_region
    _
  $region21: #{gin_forward.2} parent=0 // pred_fallthru
    _
  // Predicated region
  $region22: #{gin_forward.2} parent=0 // pred_check
    _
  $region23: #{gin_forward.2} parent=0 // pred_check_branch
    %23 = sbr.rel (0) target = $region25
  $region24: #{gin_forward.2} parent=0 // pred_region
    _
  $region25: #{gin_forward.2} parent=0 // pred_fallthru
    _
  // Predicated region
  $region26: #{gin_forward.2} parent=0 // pred_check
    _
  $region27: #{gin_forward.2} parent=0 // pred_check_branch
    %25 = sbr.rel (0) target = $region29
  $region28: #{gin_forward.2} parent=0 // pred_region
    _
  $region29: #{gin_forward.2} parent=0 // pred_fallthru
    _
  %p27 = scmp.eq.s32.totalorder 0, 0
  // Predicated region
  $region30: #{gin_forward.2} parent=0 // pred_check
    %p28 = pneg %p27
  $region31: #{gin_forward.2} parent=0 // pred_check_branch
    %30 = sbr.rel (%p28) target = $region33
  $region32: #{gin_forward.2} parent=0 // pred_region
    %v31 = vld [vmem:[%s2] sm:$0xf]
    %v32 = vld [vmem:[%s2 + $0x4] sm:$0xf]
    %v33 = vld [vmem:[%s2 + $0x8] sm:$0xf]
    %v34 = vld [vmem:[%s2 + $0xc] sm:$0xf]
    %v35 = vld [vmem:[%s2 + $0x10] sm:$0xf]
    %v36 = vld [vmem:[%s2 + $0x14] sm:$0xf]
    %v37 = vld [vmem:[%s2 + $0x18] sm:$0xf]
    %v38 = vld [vmem:[%s2 + $0x1c] sm:$0xf]
    %v39 = vld [vmem:[%s2 + $0x20] sm:$0xf]
    %v40 = vld [vmem:[%s2 + $0x24] sm:$0xf]
    %v41 = vld [vmem:[%s2 + $0x28] sm:$0xf]
    %v42 = vld [vmem:[%s2 + $0x2c] sm:$0xf]
    %v43 = vld [vmem:[%s2 + $0x30] sm:$0xf]
    %v44 = vld [vmem:[%s2 + $0x34] sm:$0xf]
    %v45 = vld [vmem:[%s2 + $0x38] sm:$0xf]
    %v46 = vld [vmem:[%s2 + $0x3c] sm:$0xf]
    %v47 = vunpack.c.l.bf16 %v31
    %v48 = vunpack.c.l.bf16 %v32
    %v49 = vunpack.c.l.bf16 %v33
    %v50 = vunpack.c.l.bf16 %v34
    %v51 = vunpack.c.l.bf16 %v35
    %v52 = vunpack.c.l.bf16 %v36
    %v53 = vunpack.c.l.bf16 %v37
    %v54 = vunpack.c.l.bf16 %v38
    %v55 = vunpack.c.l.bf16 %v39
    %v56 = vunpack.c.l.bf16 %v40
    %v57 = vunpack.c.l.bf16 %v41
    %v58 = vunpack.c.l.bf16 %v42
    %v59 = vunpack.c.l.bf16 %v43
    %v60 = vunpack.c.l.bf16 %v44
    %v61 = vunpack.c.l.bf16 %v45
    %v62 = vunpack.c.l.bf16 %v46
    %63 = vst [vmem:[#allocation2] sm:$0xff] %v47
    %64 = vst [vmem:[#allocation2 + $0x8] sm:$0xff] %v48
    %65 = vst [vmem:[#allocation2 + $0x10] sm:$0xff] %v49
    %66 = vst [vmem:[#allocation2 + $0x18] sm:$0xff] %v50
    %67 = vst [vmem:[#allocation2 + $0x20] sm:$0xff] %v51
    %68 = vst [vmem:[#allocation2 + $0x28] sm:$0xff] %v52
    %69 = vst [vmem:[#allocation2 + $0x30] sm:$0xff] %v53
    %70 = vst [vmem:[#allocation2 + $0x38] sm:$0xff] %v54
    %71 = vst [vmem:[#allocation2 + $0x40] sm:$0xff] %v55
    %72 = vst [vmem:[#allocation2 + $0x48] sm:$0xff] %v56
    %73 = vst [vmem:[#allocation2 + $0x50] sm:$0xff] %v57
    %74 = vst [vmem:[#allocation2 + $0x58] sm:$0xff] %v58
    %75 = vst [vmem:[#allocation2 + $0x60] sm:$0xff] %v59
    %76 = vst [vmem:[#allocation2 + $0x68] sm:$0xff] %v60
    %77 = vst [vmem:[#allocation2 + $0x70] sm:$0xff] %v61
    %78 = vst [vmem:[#allocation2 + $0x78] sm:$0xff] %v62
  $region33: #{gin_forward.2} parent=0 // pred_fallthru
    _
  %v79 = vld [vmem:[#allocation2] sm:$0xff]
  %v80 = vld [vmem:[#allocation2 + $0x8] sm:$0xff]
  %v81 = vld [vmem:[#allocation2 + $0x10] sm:$0xff]
  %v82 = vld [vmem:[#allocation2 + $0x18] sm:$0xff]
  %v83 = vld [vmem:[#allocation2 + $0x20] sm:$0xff]
  %v84 = vld [vmem:[#allocation2 + $0x28] sm:$0xff]
  %v85 = vld [vmem:[#allocation2 + $0x30] sm:$0xff]
  %v86 = vld [vmem:[#allocation2 + $0x38] sm:$0xff]
  %v87 = vld [vmem:[#allocation2 + $0x40] sm:$0xff]
  %v88 = vld [vmem:[#allocation2 + $0x48] sm:$0xff]
  %v89 = vld [vmem:[#allocation2 + $0x50] sm:$0xff]
  %v90 = vld [vmem:[#allocation2 + $0x58] sm:$0xff]
  %v91 = vld [vmem:[#allocation2 + $0x60] sm:$0xff]
  %v92 = vld [vmem:[#allocation2 + $0x68] sm:$0xff]
  %v93 = vld [vmem:[#allocation2 + $0x70] sm:$0xff]
  %v94 = vld [vmem:[#allocation2 + $0x78] sm:$0xff]
  %v95 = vld [vmem:[%s0] sm:$0xf]
  %v96 = vld [vmem:[%s0 + $0x4] sm:$0xf]
  %v97 = vld [vmem:[%s0 + $0x8] sm:$0xf]
  %v98 = vld [vmem:[%s0 + $0xc] sm:$0xf]
  %v99 = vld [vmem:[%s0 + $0x10] sm:$0xf]
  %v100 = vld [vmem:[%s0 + $0x14] sm:$0xf]
  %v101 = vld [vmem:[%s0 + $0x18] sm:$0xf]
  %v102 = vld [vmem:[%s0 + $0x1c] sm:$0xf]
  %v103 = vld [vmem:[%s0 + $0x20] sm:$0xf]
  %v104 = vld [vmem:[%s0 + $0x24] sm:$0xf]
  %v105 = vld [vmem:[%s0 + $0x28] sm:$0xf]
  %v106 = vld [vmem:[%s0 + $0x2c] sm:$0xf]
  %v107 = vld [vmem:[%s0 + $0x30] sm:$0xf]
  %v108 = vld [vmem:[%s0 + $0x34] sm:$0xf]
  %v109 = vld [vmem:[%s0 + $0x38] sm:$0xf]
  %v110 = vld [vmem:[%s0 + $0x3c] sm:$0xf]
  %v111 = vld [vmem:[%s1] sm:$0xf]
  %v112 = vld [vmem:[%s1 + $0x4] sm:$0xf]
  %v113 = vld [vmem:[%s1 + $0x8] sm:$0xf]
  %v114 = vld [vmem:[%s1 + $0xc] sm:$0xf]
  %v115 = vld [vmem:[%s1 + $0x10] sm:$0xf]
  %v116 = vld [vmem:[%s1 + $0x14] sm:$0xf]
  %v117 = vld [vmem:[%s1 + $0x18] sm:$0xf]
  %v118 = vld [vmem:[%s1 + $0x1c] sm:$0xf]
  %v119 = vld [vmem:[%s1 + $0x20] sm:$0xf]
  %v120 = vld [vmem:[%s1 + $0x24] sm:$0xf]
  %v121 = vld [vmem:[%s1 + $0x28] sm:$0xf]
  %v122 = vld [vmem:[%s1 + $0x2c] sm:$0xf]
  %v123 = vld [vmem:[%s1 + $0x30] sm:$0xf]
  %v124 = vld [vmem:[%s1 + $0x34] sm:$0xf]
  %v125 = vld [vmem:[%s1 + $0x38] sm:$0xf]
  %v126 = vld [vmem:[%s1 + $0x3c] sm:$0xf]
  %v143 = vunpack.c.l.b16 %v95
  %v144 = vunpack.c.l.b16 %v96
  %v145 = vunpack.c.l.b16 %v97
  %v146 = vunpack.c.l.b16 %v98
  %v147 = vunpack.c.l.b16 %v99
  %v148 = vunpack.c.l.b16 %v100
  %v149 = vunpack.c.l.b16 %v101
  %v150 = vunpack.c.l.b16 %v102
  %v151 = vunpack.c.l.b16 %v103
  %v152 = vunpack.c.l.b16 %v104
  %v153 = vunpack.c.l.b16 %v105
  %v154 = vunpack.c.l.b16 %v106
  %v155 = vunpack.c.l.b16 %v107
  %v156 = vunpack.c.l.b16 %v108
  %v157 = vunpack.c.l.b16 %v109
  %v158 = vunpack.c.l.b16 %v110
  %v159 = vpack.c.b16 %v144, %v143
  %v160 = vpack.c.b16 %v146, %v145
  %v161 = vpack.c.b16 %v148, %v147
  %v162 = vpack.c.b16 %v150, %v149
  %v163 = vpack.c.b16 %v152, %v151
  %v164 = vpack.c.b16 %v154, %v153
  %v165 = vpack.c.b16 %v156, %v155
  %v166 = vpack.c.b16 %v158, %v157
  %v191 = vunpack.c.l.b16 %v111
  %v192 = vunpack.c.l.b16 %v112
  %v193 = vunpack.c.l.b16 %v113
  %v194 = vunpack.c.l.b16 %v114
  %v195 = vunpack.c.l.b16 %v115
  %v196 = vunpack.c.l.b16 %v116
  %v197 = vunpack.c.l.b16 %v117
  %v198 = vunpack.c.l.b16 %v118
  %v199 = vunpack.c.l.b16 %v119
  %v200 = vunpack.c.l.b16 %v120
  %v201 = vunpack.c.l.b16 %v121
  %v202 = vunpack.c.l.b16 %v122
  %v203 = vunpack.c.l.b16 %v123
  %v204 = vunpack.c.l.b16 %v124
  %v205 = vunpack.c.l.b16 %v125
  %v206 = vunpack.c.l.b16 %v126
  %v207 = vpack.c.b16 %v192, %v191
  %v208 = vpack.c.b16 %v194, %v193
  %v209 = vpack.c.b16 %v196, %v195
  %v210 = vpack.c.b16 %v198, %v197
  %v211 = vpack.c.b16 %v200, %v199
  %v212 = vpack.c.b16 %v202, %v201
  %v213 = vpack.c.b16 %v204, %v203
  %v214 = vpack.c.b16 %v206, %v205
  %223 = vmatprep.subr.bf16.mxu0 0
  %224 = vmatpush1.bf16.msra.mxu0 %v207
  %225 = vmatprep.subr.bf16.mxu0 0
  %226 = vmatpush1.bf16.msra.mxu0 %v208
  %227 = vmatprep.subr.bf16.mxu0 0
  %228 = vmatpush1.bf16.msra.mxu0 %v209
  %229 = vmatprep.subr.bf16.mxu0 0
  %230 = vmatpush1.bf16.msra.mxu0 %v210
  %231 = vmatprep.subr.bf16.mxu0 0
  %232 = vmatpush1.bf16.msra.mxu0 %v211
  %233 = vmatprep.subr.bf16.mxu0 0
  %234 = vmatpush1.bf16.msra.mxu0 %v212
  %235 = vmatprep.subr.bf16.mxu0 0
  %236 = vmatpush1.bf16.msra.mxu0 %v213
  %237 = vmatprep.subr.bf16.mxu0 0
  %238 = vmatpush1.bf16.msra.mxu0 %v214
  %239 = vmatprep.subr.bf16.mxu0 0
  %240 = vmatpush1.bf16.msra.mxu0 0
  %241 = vmatprep.subr.bf16.mxu0 0
  %242 = vmatpush1.bf16.msra.mxu0 0
  %243 = vmatprep.subr.bf16.mxu0 0
  %244 = vmatpush1.bf16.msra.mxu0 0
  %245 = vmatprep.subr.bf16.mxu0 0
  %246 = vmatpush1.bf16.msra.mxu0 0
  %247 = vmatprep.subr.bf16.mxu0 0
  %248 = vmatpush1.bf16.msra.mxu0 0
  %249 = vmatprep.subr.bf16.mxu0 0
  %250 = vmatpush1.bf16.msra.mxu0 0
  %251 = vmatprep.subr.bf16.mxu0 0
  %252 = vmatpush1.bf16.msra.mxu0 0
  %253 = vmatprep.subr.bf16.mxu0 0
  %254 = vmatpush1.bf16.msra.mxu0 0
  %255 = vmatprep.mubr.bf16.mxu0 0
  %256 = vmatmul.mubr.bf16.gmra.mrb[0].mxu0 %v159
  %v257 = vpop.f32.mrb[0].mxu0
  %v258 = vadd.f32 0.0, %v257
  %v259 = vpop.f32.mrb[0].mxu0
  %v260 = vpop.f32.mrb[0].mxu0
  %v261 = vadd.f32 0.0, %v260
  %v262 = vpop.f32.mrb[0].mxu0
  %263 = vmatprep.mubr.bf16.mxu0 0
  %264 = vmatmul.mubr.bf16.gmra.mrb[0].mxu0 %v160
  %v265 = vpop.f32.mrb[0].mxu0
  %v266 = vadd.f32 0.0, %v265
  %v267 = vpop.f32.mrb[0].mxu0
  %v268 = vpop.f32.mrb[0].mxu0
  %v269 = vadd.f32 0.0, %v268
  %v270 = vpop.f32.mrb[0].mxu0
  %271 = vmatprep.mubr.bf16.mxu0 0
  %272 = vmatmul.mubr.bf16.gmra.mrb[0].mxu0 %v161
  %v273 = vpop.f32.mrb[0].mxu0
  %v274 = vadd.f32 0.0, %v273
  %v275 = vpop.f32.mrb[0].mxu0
  %v276 = vpop.f32.mrb[0].mxu0
  %v277 = vadd.f32 0.0, %v276
  %v278 = vpop.f32.mrb[0].mxu0
  %279 = vmatprep.mubr.bf16.mxu0 0
  %280 = vmatmul.mubr.bf16.gmra.mrb[0].mxu0 %v162
  %v281 = vpop.f32.mrb[0].mxu0
  %v282 = vadd.f32 0.0, %v281
  %v283 = vpop.f32.mrb[0].mxu0
  %v284 = vpop.f32.mrb[0].mxu0
  %v285 = vadd.f32 0.0, %v284
  %v286 = vpop.f32.mrb[0].mxu0
  %287 = vmatprep.mubr.bf16.mxu0 0
  %288 = vmatmul.mubr.bf16.gmra.mrb[0].mxu0 %v163
  %v289 = vpop.f32.mrb[0].mxu0
  %v290 = vadd.f32 0.0, %v289
  %v291 = vpop.f32.mrb[0].mxu0
  %v292 = vpop.f32.mrb[0].mxu0
  %v293 = vadd.f32 0.0, %v292
  %v294 = vpop.f32.mrb[0].mxu0
  %295 = vmatprep.mubr.bf16.mxu0 0
  %296 = vmatmul.mubr.bf16.gmra.mrb[0].mxu0 %v164
  %v297 = vpop.f32.mrb[0].mxu0
  %v298 = vadd.f32 0.0, %v297
  %v299 = vpop.f32.mrb[0].mxu0
  %v300 = vpop.f32.mrb[0].mxu0
  %v301 = vadd.f32 0.0, %v300
  %v302 = vpop.f32.mrb[0].mxu0
  %303 = vmatprep.mubr.bf16.mxu0 0
  %304 = vmatmul.mubr.bf16.gmra.mrb[0].mxu0 %v165
  %v305 = vpop.f32.mrb[0].mxu0
  %v306 = vadd.f32 0.0, %v305
  %v307 = vpop.f32.mrb[0].mxu0
  %v308 = vpop.f32.mrb[0].mxu0
  %v309 = vadd.f32 0.0, %v308
  %v310 = vpop.f32.mrb[0].mxu0
  %311 = vmatprep.mubr.bf16.mxu0 0
  %312 = vmatmul.mubr.bf16.gmra.mrb[0].mxu0 %v166
  %v313 = vpop.f32.mrb[0].mxu0
  %v314 = vadd.f32 0.0, %v313
  %v315 = vpop.f32.mrb[0].mxu0
  %v316 = vpop.f32.mrb[0].mxu0
  %v317 = vadd.f32 0.0, %v316
  %v318 = vpop.f32.mrb[0].mxu0
  %319 = vdwg.mxu0
  %v320 = vadd.f32 %v79, %v258
  %v321 = vadd.f32 %v80, %v261
  %v322 = vadd.f32 %v81, %v266
  %v323 = vadd.f32 %v82, %v269
  %v324 = vadd.f32 %v83, %v274
  %v325 = vadd.f32 %v84, %v277
  %v326 = vadd.f32 %v85, %v282
  %v327 = vadd.f32 %v86, %v285
  %v328 = vadd.f32 %v87, %v290
  %v329 = vadd.f32 %v88, %v293
  %v330 = vadd.f32 %v89, %v298
  %v331 = vadd.f32 %v90, %v301
  %v332 = vadd.f32 %v91, %v306
  %v333 = vadd.f32 %v92, %v309
  %v334 = vadd.f32 %v93, %v314
  %v335 = vadd.f32 %v94, %v317
  %336 = vst [vmem:[#allocation2] sm:$0xff] %v320
  %337 = vst [vmem:[#allocation2 + $0x8] sm:$0xff] %v321
  %338 = vst [vmem:[#allocation2 + $0x10] sm:$0xff] %v322
  %339 = vst [vmem:[#allocation2 + $0x18] sm:$0xff] %v323
  %340 = vst [vmem:[#allocation2 + $0x20] sm:$0xff] %v324
  %341 = vst [vmem:[#allocation2 + $0x28] sm:$0xff] %v325
  %342 = vst [vmem:[#allocation2 + $0x30] sm:$0xff] %v326
  %343 = vst [vmem:[#allocation2 + $0x38] sm:$0xff] %v327
  %344 = vst [vmem:[#allocation2 + $0x40] sm:$0xff] %v328
  %345 = vst [vmem:[#allocation2 + $0x48] sm:$0xff] %v329
  %346 = vst [vmem:[#allocation2 + $0x50] sm:$0xff] %v330
  %347 = vst [vmem:[#allocation2 + $0x58] sm:$0xff] %v331
  %348 = vst [vmem:[#allocation2 + $0x60] sm:$0xff] %v332
  %349 = vst [vmem:[#allocation2 + $0x68] sm:$0xff] %v333
  %350 = vst [vmem:[#allocation2 + $0x70] sm:$0xff] %v334
  %351 = vst [vmem:[#allocation2 + $0x78] sm:$0xff] %v335
  // Predicated region
  $region34: #{gin_forward.2} parent=0 // pred_check
    %p352 = pneg %p27
  $region35: #{gin_forward.2} parent=0 // pred_check_branch
    %354 = sbr.rel (%p352) target = $region37
  $region36: #{gin_forward.2} parent=0 // pred_region
    %v355 = vld [vmem:[#allocation2] sm:$0xff]
    %v356 = vld [vmem:[#allocation2 + $0x8] sm:$0xff]
    %v357 = vld [vmem:[#allocation2 + $0x10] sm:$0xff]
    %v358 = vld [vmem:[#allocation2 + $0x18] sm:$0xff]
    %v359 = vld [vmem:[#allocation2 + $0x20] sm:$0xff]
    %v360 = vld [vmem:[#allocation2 + $0x28] sm:$0xff]
    %v361 = vld [vmem:[#allocation2 + $0x30] sm:$0xff]
    %v362 = vld [vmem:[#allocation2 + $0x38] sm:$0xff]
    %v363 = vld [vmem:[#allocation2 + $0x40] sm:$0xff]
    %v364 = vld [vmem:[#allocation2 + $0x48] sm:$0xff]
    %v365 = vld [vmem:[#allocation2 + $0x50] sm:$0xff]
    %v366 = vld [vmem:[#allocation2 + $0x58] sm:$0xff]
    %v367 = vld [vmem:[#allocation2 + $0x60] sm:$0xff]
    %v368 = vld [vmem:[#allocation2 + $0x68] sm:$0xff]
    %v369 = vld [vmem:[#allocation2 + $0x70] sm:$0xff]
    %v370 = vld [vmem:[#allocation2 + $0x78] sm:$0xff]
    %v371 = vpack.c.bf16 %v356, %v355
    %v372 = vpack.c.bf16 %v358, %v357
    %v373 = vpack.c.bf16 %v360, %v359
    %v374 = vpack.c.bf16 %v362, %v361
    %v375 = vpack.c.bf16 %v364, %v363
    %v376 = vpack.c.bf16 %v366, %v365
    %v377 = vpack.c.bf16 %v368, %v367
    %v378 = vpack.c.bf16 %v370, %v369
    %v379 = vld [vmem:[%s3] sm:$0xf]
    %v380 = vld [vmem:[%s3 + $0x4] sm:$0xf]
    %v381 = vld [vmem:[%s3 + $0x8] sm:$0xf]
    %v382 = vld [vmem:[%s3 + $0xc] sm:$0xf]
    %v383 = vld [vmem:[%s3 + $0x10] sm:$0xf]
    %v384 = vld [vmem:[%s3 + $0x14] sm:$0xf]
    %v385 = vld [vmem:[%s3 + $0x18] sm:$0xf]
    %v386 = vld [vmem:[%s3 + $0x1c] sm:$0xf]
    %v387 = vld [vmem:[%s3 + $0x20] sm:$0xf]
    %v388 = vld [vmem:[%s3 + $0x24] sm:$0xf]
    %v389 = vld [vmem:[%s3 + $0x28] sm:$0xf]
    %v390 = vld [vmem:[%s3 + $0x2c] sm:$0xf]
    %v391 = vld [vmem:[%s3 + $0x30] sm:$0xf]
    %v392 = vld [vmem:[%s3 + $0x34] sm:$0xf]
    %v393 = vld [vmem:[%s3 + $0x38] sm:$0xf]
    %v394 = vld [vmem:[%s3 + $0x3c] sm:$0xf]
    %v395 = vld [vmem:[%s4] sm:$0x1]
    %v397 = vlaneseq
    %v398 = vshrl.u32 %v397, 7
    %v399 = vsub.s32 0, %v398
    %v400 = vrot.slane %v395, %v399
    %v418 = vunpack.c.l.b16 %v379
    %v419 = vunpack.c.l.b16 %v380
    %v420 = vunpack.c.l.b16 %v381
    %v421 = vunpack.c.l.b16 %v382
    %v422 = vunpack.c.l.b16 %v383
    %v423 = vunpack.c.l.b16 %v384
    %v424 = vunpack.c.l.b16 %v385
    %v425 = vunpack.c.l.b16 %v386
    %v426 = vunpack.c.l.b16 %v387
    %v427 = vunpack.c.l.b16 %v388
    %v428 = vunpack.c.l.b16 %v389
    %v429 = vunpack.c.l.b16 %v390
    %v430 = vunpack.c.l.b16 %v391
    %v431 = vunpack.c.l.b16 %v392
    %v432 = vunpack.c.l.b16 %v393
    %v433 = vunpack.c.l.b16 %v394
    %v434 = vpack.c.b16 %v419, %v418
    %v435 = vpack.c.b16 %v421, %v420
    %v436 = vpack.c.b16 %v423, %v422
    %v437 = vpack.c.b16 %v425, %v424
    %v438 = vpack.c.b16 %v427, %v426
    %v439 = vpack.c.b16 %v429, %v428
    %v440 = vpack.c.b16 %v431, %v430
    %v441 = vpack.c.b16 %v433, %v432
    %450 = vmatprep.subr.bf16.mxu0 0
    %451 = vmatpush1.bf16.msra.mxu0 %v434
    %452 = vmatprep.subr.bf16.mxu0 0
    %453 = vmatpush1.bf16.msra.mxu0 %v435
    %454 = vmatprep.subr.bf16.mxu0 0
    %455 = vmatpush1.bf16.msra.mxu0 %v436
    %456 = vmatprep.subr.bf16.mxu0 0
    %457 = vmatpush1.bf16.msra.mxu0 %v437
    %458 = vmatprep.subr.bf16.mxu0 0
    %459 = vmatpush1.bf16.msra.mxu0 %v438
    %460 = vmatprep.subr.bf16.mxu0 0
    %461 = vmatpush1.bf16.msra.mxu0 %v439
    %462 = vmatprep.subr.bf16.mxu0 0
    %463 = vmatpush1.bf16.msra.mxu0 %v440
    %464 = vmatprep.subr.bf16.mxu0 0
    %465 = vmatpush1.bf16.msra.mxu0 %v441
    %466 = vmatprep.subr.bf16.mxu0 0
    %467 = vmatpush1.bf16.msra.mxu0 0
    %468 = vmatprep.subr.bf16.mxu0 0
    %469 = vmatpush1.bf16.msra.mxu0 0
    %470 = vmatprep.subr.bf16.mxu0 0
    %471 = vmatpush1.bf16.msra.mxu0 0
    %472 = vmatprep.subr.bf16.mxu0 0
    %473 = vmatpush1.bf16.msra.mxu0 0
    %474 = vmatprep.subr.bf16.mxu0 0
    %475 = vmatpush1.bf16.msra.mxu0 0
    %476 = vmatprep.subr.bf16.mxu0 0
    %477 = vmatpush1.bf16.msra.mxu0 0
    %478 = vmatprep.subr.bf16.mxu0 0
    %479 = vmatpush1.bf16.msra.mxu0 0
    %480 = vmatprep.subr.bf16.mxu0 0
    %481 = vmatpush1.bf16.msra.mxu0 0
    %482 = vmatprep.mubr.bf16.mxu0 0
    %483 = vmatmul.mubr.bf16.gmra.mrb[0].mxu0 %v371
    %v484 = vpop.f32.mrb[0].mxu0
    %v485 = vadd.f32 %v400, %v484
    %v486 = vpop.f32.mrb[0].mxu0
    %v487 = vpop.f32.mrb[0].mxu0
    %v488 = vadd.f32 %v400, %v487
    %v489 = vpop.f32.mrb[0].mxu0
    %490 = vmatprep.mubr.bf16.mxu0 0
    %491 = vmatmul.mubr.bf16.gmra.mrb[0].mxu0 %v372
    %v492 = vpop.f32.mrb[0].mxu0
    %v493 = vadd.f32 %v400, %v492
    %v494 = vpop.f32.mrb[0].mxu0
    %v495 = vpop.f32.mrb[0].mxu0
    %v496 = vadd.f32 %v400, %v495
    %v497 = vpop.f32.mrb[0].mxu0
    %498 = vmatprep.mubr.bf16.mxu0 0
    %499 = vmatmul.mubr.bf16.gmra.mrb[0].mxu0 %v373
    %v500 = vpop.f32.mrb[0].mxu0
    %v501 = vadd.f32 %v400, %v500
    %v502 = vpop.f32.mrb[0].mxu0
    %v503 = vpop.f32.mrb[0].mxu0
    %v504 = vadd.f32 %v400, %v503
    %v505 = vpop.f32.mrb[0].mxu0
    %506 = vmatprep.mubr.bf16.mxu0 0
    %507 = vmatmul.mubr.bf16.gmra.mrb[0].mxu0 %v374
    %v508 = vpop.f32.mrb[0].mxu0
    %v509 = vadd.f32 %v400, %v508
    %v510 = vpop.f32.mrb[0].mxu0
    %v511 = vpop.f32.mrb[0].mxu0
    %v512 = vadd.f32 %v400, %v511
    %v513 = vpop.f32.mrb[0].mxu0
    %514 = vmatprep.mubr.bf16.mxu0 0
    %515 = vmatmul.mubr.bf16.gmra.mrb[0].mxu0 %v375
    %v516 = vpop.f32.mrb[0].mxu0
    %v517 = vadd.f32 %v400, %v516
    %v518 = vpop.f32.mrb[0].mxu0
    %v519 = vpop.f32.mrb[0].mxu0
    %v520 = vadd.f32 %v400, %v519
    %v521 = vpop.f32.mrb[0].mxu0
    %522 = vmatprep.mubr.bf16.mxu0 0
    %523 = vmatmul.mubr.bf16.gmra.mrb[0].mxu0 %v376
    %v524 = vpop.f32.mrb[0].mxu0
    %v525 = vadd.f32 %v400, %v524
    %v526 = vpop.f32.mrb[0].mxu0
    %v527 = vpop.f32.mrb[0].mxu0
    %v528 = vadd.f32 %v400, %v527
    %v529 = vpop.f32.mrb[0].mxu0
    %530 = vmatprep.mubr.bf16.mxu0 0
    %531 = vmatmul.mubr.bf16.gmra.mrb[0].mxu0 %v377
    %v532 = vpop.f32.mrb[0].mxu0
    %v533 = vadd.f32 %v400, %v532
    %v534 = vpop.f32.mrb[0].mxu0
    %v535 = vpop.f32.mrb[0].mxu0
    %v536 = vadd.f32 %v400, %v535
    %v537 = vpop.f32.mrb[0].mxu0
    %538 = vmatprep.mubr.bf16.mxu0 0
    %539 = vmatmul.mubr.bf16.gmra.mrb[0].mxu0 %v378
    %v540 = vpop.f32.mrb[0].mxu0
    %v541 = vadd.f32 %v400, %v540
    %v542 = vpop.f32.mrb[0].mxu0
    %v543 = vpop.f32.mrb[0].mxu0
    %v544 = vadd.f32 %v400, %v543
    %v545 = vpop.f32.mrb[0].mxu0
    %546 = vdwg.mxu0
    %v547 = vmax.f32 %v485, 0.0
    %v548 = vmax.f32 %v488, 0.0
    %v549 = vmax.f32 %v493, 0.0
    %v550 = vmax.f32 %v496, 0.0
    %v551 = vmax.f32 %v501, 0.0
    %v552 = vmax.f32 %v504, 0.0
    %v553 = vmax.f32 %v509, 0.0
    %v554 = vmax.f32 %v512, 0.0
    %v555 = vmax.f32 %v517, 0.0
    %v556 = vmax.f32 %v520, 0.0
    %v557 = vmax.f32 %v525, 0.0
    %v558 = vmax.f32 %v528, 0.0
    %v559 = vmax.f32 %v533, 0.0
    %v560 = vmax.f32 %v536, 0.0
    %v561 = vmax.f32 %v541, 0.0
    %v562 = vmax.f32 %v544, 0.0
    %v563 = vpack.c.bf16 %v548, %v547
    %v564 = vpack.c.bf16 %v550, %v549
    %v565 = vpack.c.bf16 %v552, %v551
    %v566 = vpack.c.bf16 %v554, %v553
    %v567 = vpack.c.bf16 %v556, %v555
    %v568 = vpack.c.bf16 %v558, %v557
    %v569 = vpack.c.bf16 %v560, %v559
    %v570 = vpack.c.bf16 %v562, %v561
    %v571 = vld [vmem:[%s5] sm:$0xf]
    %v572 = vld [vmem:[%s5 + $0x4] sm:$0xf]
    %v573 = vld [vmem:[%s5 + $0x8] sm:$0xf]
    %v574 = vld [vmem:[%s5 + $0xc] sm:$0xf]
    %v575 = vld [vmem:[%s5 + $0x10] sm:$0xf]
    %v576 = vld [vmem:[%s5 + $0x14] sm:$0xf]
    %v577 = vld [vmem:[%s5 + $0x18] sm:$0xf]
    %v578 = vld [vmem:[%s5 + $0x1c] sm:$0xf]
    %v579 = vld [vmem:[%s5 + $0x20] sm:$0xf]
    %v580 = vld [vmem:[%s5 + $0x24] sm:$0xf]
    %v581 = vld [vmem:[%s5 + $0x28] sm:$0xf]
    %v582 = vld [vmem:[%s5 + $0x2c] sm:$0xf]
    %v583 = vld [vmem:[%s5 + $0x30] sm:$0xf]
    %v584 = vld [vmem:[%s5 + $0x34] sm:$0xf]
    %v585 = vld [vmem:[%s5 + $0x38] sm:$0xf]
    %v586 = vld [vmem:[%s5 + $0x3c] sm:$0xf]
    %v587 = vld [vmem:[%s6] sm:$0x1]
    %v589 = vlaneseq
    %v590 = vshrl.u32 %v589, 7
    %v591 = vsub.s32 0, %v590
    %v592 = vrot.slane %v587, %v591
    %v610 = vunpack.c.l.b16 %v571
    %v611 = vunpack.c.l.b16 %v572
    %v612 = vunpack.c.l.b16 %v573
    %v613 = vunpack.c.l.b16 %v574
    %v614 = vunpack.c.l.b16 %v575
    %v615 = vunpack.c.l.b16 %v576
    %v616 = vunpack.c.l.b16 %v577
    %v617 = vunpack.c.l.b16 %v578
    %v618 = vunpack.c.l.b16 %v579
    %v619 = vunpack.c.l.b16 %v580
    %v620 = vunpack.c.l.b16 %v581
    %v621 = vunpack.c.l.b16 %v582
    %v622 = vunpack.c.l.b16 %v583
    %v623 = vunpack.c.l.b16 %v584
    %v624 = vunpack.c.l.b16 %v585
    %v625 = vunpack.c.l.b16 %v586
    %v626 = vpack.c.b16 %v611, %v610
    %v627 = vpack.c.b16 %v613, %v612
    %v628 = vpack.c.b16 %v615, %v614
    %v629 = vpack.c.b16 %v617, %v616
    %v630 = vpack.c.b16 %v619, %v618
    %v631 = vpack.c.b16 %v621, %v620
    %v632 = vpack.c.b16 %v623, %v622
    %v633 = vpack.c.b16 %v625, %v624
    %642 = vmatprep.subr.bf16.mxu0 0
    %643 = vmatpush1.bf16.msra.mxu0 %v626
    %644 = vmatprep.subr.bf16.mxu0 0
    %645 = vmatpush1.bf16.msra.mxu0 %v627
    %646 = vmatprep.subr.bf16.mxu0 0
    %647 = vmatpush1.bf16.msra.mxu0 %v628
    %648 = vmatprep.subr.bf16.mxu0 0
    %649 = vmatpush1.bf16.msra.mxu0 %v629
    %650 = vmatprep.subr.bf16.mxu0 0
    %651 = vmatpush1.bf16.msra.mxu0 %v630
    %652 = vmatprep.subr.bf16.mxu0 0
    %653 = vmatpush1.bf16.msra.mxu0 %v631
    %654 = vmatprep.subr.bf16.mxu0 0
    %655 = vmatpush1.bf16.msra.mxu0 %v632
    %656 = vmatprep.subr.bf16.mxu0 0
    %657 = vmatpush1.bf16.msra.mxu0 %v633
    %658 = vmatprep.subr.bf16.mxu0 0
    %659 = vmatpush1.bf16.msra.mxu0 0
    %660 = vmatprep.subr.bf16.mxu0 0
    %661 = vmatpush1.bf16.msra.mxu0 0
    %662 = vmatprep.subr.bf16.mxu0 0
    %663 = vmatpush1.bf16.msra.mxu0 0
    %664 = vmatprep.subr.bf16.mxu0 0
    %665 = vmatpush1.bf16.msra.mxu0 0
    %666 = vmatprep.subr.bf16.mxu0 0
    %667 = vmatpush1.bf16.msra.mxu0 0
    %668 = vmatprep.subr.bf16.mxu0 0
    %669 = vmatpush1.bf16.msra.mxu0 0
    %670 = vmatprep.subr.bf16.mxu0 0
    %671 = vmatpush1.bf16.msra.mxu0 0
    %672 = vmatprep.subr.bf16.mxu0 0
    %673 = vmatpush1.bf16.msra.mxu0 0
    %674 = vmatprep.mubr.bf16.mxu0 0
    %675 = vmatmul.mubr.bf16.gmra.mrb[0].mxu0 %v563
    %v676 = vpop.f32.mrb[0].mxu0
    %v677 = vadd.f32 %v592, %v676
    %v678 = vpop.f32.mrb[0].mxu0
    %v679 = vpop.f32.mrb[0].mxu0
    %v680 = vadd.f32 %v592, %v679
    %v681 = vpop.f32.mrb[0].mxu0
    %682 = vmatprep.mubr.bf16.mxu0 0
    %683 = vmatmul.mubr.bf16.gmra.mrb[0].mxu0 %v564
    %v684 = vpop.f32.mrb[0].mxu0
    %v685 = vadd.f32 %v592, %v684
    %v686 = vpop.f32.mrb[0].mxu0
    %v687 = vpop.f32.mrb[0].mxu0
    %v688 = vadd.f32 %v592, %v687
    %v689 = vpop.f32.mrb[0].mxu0
    %690 = vmatprep.mubr.bf16.mxu0 0
    %691 = vmatmul.mubr.bf16.gmra.mrb[0].mxu0 %v565
    %v692 = vpop.f32.mrb[0].mxu0
    %v693 = vadd.f32 %v592, %v692
    %v694 = vpop.f32.mrb[0].mxu0
    %v695 = vpop.f32.mrb[0].mxu0
    %v696 = vadd.f32 %v592, %v695
    %v697 = vpop.f32.mrb[0].mxu0
    %698 = vmatprep.mubr.bf16.mxu0 0
    %699 = vmatmul.mubr.bf16.gmra.mrb[0].mxu0 %v566
    %v700 = vpop.f32.mrb[0].mxu0
    %v701 = vadd.f32 %v592, %v700
    %v702 = vpop.f32.mrb[0].mxu0
    %v703 = vpop.f32.mrb[0].mxu0
    %v704 = vadd.f32 %v592, %v703
    %v705 = vpop.f32.mrb[0].mxu0
    %706 = vmatprep.mubr.bf16.mxu0 0
    %707 = vmatmul.mubr.bf16.gmra.mrb[0].mxu0 %v567
    %v708 = vpop.f32.mrb[0].mxu0
    %v709 = vadd.f32 %v592, %v708
    %v710 = vpop.f32.mrb[0].mxu0
    %v711 = vpop.f32.mrb[0].mxu0
    %v712 = vadd.f32 %v592, %v711
    %v713 = vpop.f32.mrb[0].mxu0
    %714 = vmatprep.mubr.bf16.mxu0 0
    %715 = vmatmul.mubr.bf16.gmra.mrb[0].mxu0 %v568
    %v716 = vpop.f32.mrb[0].mxu0
    %v717 = vadd.f32 %v592, %v716
    %v718 = vpop.f32.mrb[0].mxu0
    %v719 = vpop.f32.mrb[0].mxu0
    %v720 = vadd.f32 %v592, %v719
    %v721 = vpop.f32.mrb[0].mxu0
    %722 = vmatprep.mubr.bf16.mxu0 0
    %723 = vmatmul.mubr.bf16.gmra.mrb[0].mxu0 %v569
    %v724 = vpop.f32.mrb[0].mxu0
    %v725 = vadd.f32 %v592, %v724
    %v726 = vpop.f32.mrb[0].mxu0
    %v727 = vpop.f32.mrb[0].mxu0
    %v728 = vadd.f32 %v592, %v727
    %v729 = vpop.f32.mrb[0].mxu0
    %730 = vmatprep.mubr.bf16.mxu0 0
    %731 = vmatmul.mubr.bf16.gmra.mrb[0].mxu0 %v570
    %v732 = vpop.f32.mrb[0].mxu0
    %v733 = vadd.f32 %v592, %v732
    %v734 = vpop.f32.mrb[0].mxu0
    %v735 = vpop.f32.mrb[0].mxu0
    %v736 = vadd.f32 %v592, %v735
    %v737 = vpop.f32.mrb[0].mxu0
    %738 = vdwg.mxu0
    %v739 = vmax.f32 %v677, 0.0
    %v740 = vmax.f32 %v680, 0.0
    %v741 = vmax.f32 %v685, 0.0
    %v742 = vmax.f32 %v688, 0.0
    %v743 = vmax.f32 %v693, 0.0
    %v744 = vmax.f32 %v696, 0.0
    %v745 = vmax.f32 %v701, 0.0
    %v746 = vmax.f32 %v704, 0.0
    %v747 = vmax.f32 %v709, 0.0
    %v748 = vmax.f32 %v712, 0.0
    %v749 = vmax.f32 %v717, 0.0
    %v750 = vmax.f32 %v720, 0.0
    %v751 = vmax.f32 %v725, 0.0
    %v752 = vmax.f32 %v728, 0.0
    %v753 = vmax.f32 %v733, 0.0
    %v754 = vmax.f32 %v736, 0.0
    %v755 = vpack.c.bf16 %v740, %v739
    %v756 = vpack.c.bf16 %v742, %v741
    %v757 = vpack.c.bf16 %v744, %v743
    %v758 = vpack.c.bf16 %v746, %v745
    %v759 = vpack.c.bf16 %v748, %v747
    %v760 = vpack.c.bf16 %v750, %v749
    %v761 = vpack.c.bf16 %v752, %v751
    %v762 = vpack.c.bf16 %v754, %v753
    %v771 = vunpack.c.l.b16 %v755
    %v772 = vunpack.c.h.b16 %v755
    %v773 = vunpack.c.l.b16 %v756
    %v774 = vunpack.c.h.b16 %v756
    %v775 = vunpack.c.l.b16 %v757
    %v776 = vunpack.c.h.b16 %v757
    %v777 = vunpack.c.l.b16 %v758
    %v778 = vunpack.c.h.b16 %v758
    %v779 = vunpack.c.l.b16 %v759
    %v780 = vunpack.c.h.b16 %v759
    %v781 = vunpack.c.l.b16 %v760
    %v782 = vunpack.c.h.b16 %v760
    %v783 = vunpack.c.l.b16 %v761
    %v784 = vunpack.c.h.b16 %v761
    %v785 = vunpack.c.l.b16 %v762
    %v786 = vunpack.c.h.b16 %v762
    %v787 = vpack.c.b16 %v771, %v771
    %v788 = vpack.c.b16 %v772, %v772
    %v789 = vpack.c.b16 %v773, %v773
    %v790 = vpack.c.b16 %v774, %v774
    %v791 = vpack.c.b16 %v775, %v775
    %v792 = vpack.c.b16 %v776, %v776
    %v793 = vpack.c.b16 %v777, %v777
    %v794 = vpack.c.b16 %v778, %v778
    %v795 = vpack.c.b16 %v779, %v779
    %v796 = vpack.c.b16 %v780, %v780
    %v797 = vpack.c.b16 %v781, %v781
    %v798 = vpack.c.b16 %v782, %v782
    %v799 = vpack.c.b16 %v783, %v783
    %v800 = vpack.c.b16 %v784, %v784
    %v801 = vpack.c.b16 %v785, %v785
    %v802 = vpack.c.b16 %v786, %v786
    %819 = vst [vmem:[%s7] sm:$0xf] %v787
    %820 = vst [vmem:[%s7 + $0x4] sm:$0xf] %v788
    %821 = vst [vmem:[%s7 + $0x8] sm:$0xf] %v789
    %822 = vst [vmem:[%s7 + $0xc] sm:$0xf] %v790
    %823 = vst [vmem:[%s7 + $0x10] sm:$0xf] %v791
    %824 = vst [vmem:[%s7 + $0x14] sm:$0xf] %v792
    %825 = vst [vmem:[%s7 + $0x18] sm:$0xf] %v793
    %826 = vst [vmem:[%s7 + $0x1c] sm:$0xf] %v794
    %827 = vst [vmem:[%s7 + $0x20] sm:$0xf] %v795
    %828 = vst [vmem:[%s7 + $0x24] sm:$0xf] %v796
    %829 = vst [vmem:[%s7 + $0x28] sm:$0xf] %v797
    %830 = vst [vmem:[%s7 + $0x2c] sm:$0xf] %v798
    %831 = vst [vmem:[%s7 + $0x30] sm:$0xf] %v799
    %832 = vst [vmem:[%s7 + $0x34] sm:$0xf] %v800
    %833 = vst [vmem:[%s7 + $0x38] sm:$0xf] %v801
    %834 = vst [vmem:[%s7 + $0x3c] sm:$0xf] %v802
  $region37: #{gin_forward.2} parent=0 // pred_fallthru
    _
  // Predicated region
  $region38: #{gin_forward.2} parent=0 // pred_check
    _
  $region39: #{gin_forward.2} parent=0 // pred_check_branch
    %836 = sbr.rel (0) target = $region41
  $region40: #{gin_forward.2} parent=0 // pred_region
    _
  $region41: #{gin_forward.2} parent=0 // pred_fallthru
    _
  // Predicated region
  $region42: #{gin_forward.2} parent=0 // pred_check
    _
  $region43: #{gin_forward.2} parent=0 // pred_check_branch
    %838 = sbr.rel (0) target = $region45
  $region44: #{gin_forward.2} parent=0 // pred_region
    _
  $region45: #{gin_forward.2} parent=0 // pred_fallthru
    _

</llo_original>
